<compile_context>
chip_gen: v7x
topology: tpu7x:2x2x1
jax: 0.10.0
libtpu: 0.0.40
codegen_flags: <defaults>
</compile_context>

<pallas_src>
import functools
import numpy as np
import jax
import jax.numpy as jnp
from jax import lax
from jax.experimental import pallas as pl
from jax.experimental.pallas import tpu as pltpu

LN_EPS = 1e-5  # PyTorch nn.LayerNorm default


def _layernorm(x, gamma, beta):
    # Two-pass form (PyTorch-equivalent numerics); gamma folded into the scale.
    mu = jnp.mean(x, axis=-1, keepdims=True)
    c = x - mu
    var = jnp.mean(c * c, axis=-1, keepdims=True)
    return c * (lax.rsqrt(var + LN_EPS) * gamma) + beta


def critic_kernel(sa_ref, w1_ref, w2a_ref, ln1_ref, p2_ref, bq_ref, out_ref,
                  *, input_dims, fc1_dims):
    # single moving input: [state | action]
    sa = sa_ref[...]
    state = sa[:, :input_dims]
    action = sa[:, input_dims:]

    # packed resident params
    w2a = w2a_ref[...]
    w2 = w2a[:fc1_dims, :]
    wa = w2a[fc1_dims:, :]

    ln1 = ln1_ref[...]
    b1, g1, be1 = ln1[0:1, :], ln1[1:2, :], ln1[2:3, :]

    p2 = p2_ref[...]
    b2, g2, be2, ba, wq = (p2[0:1, :], p2[1:2, :], p2[2:3, :],
                           p2[3:4, :], p2[4:5, :])

    # fc1 -> LayerNorm -> ReLU
    h = jnp.dot(state, w1_ref[...], preferred_element_type=jnp.float32) + b1
    h = jnp.maximum(_layernorm(h, g1, be1), 0.0)

    # fc2 -> LayerNorm   (no ReLU here, matches the PyTorch forward)
    h = jnp.dot(h, w2, preferred_element_type=jnp.float32) + b2
    h = _layernorm(h, g2, be2)

    # action branch: Linear -> ReLU
    av = jnp.maximum(
        jnp.dot(action, wa, preferred_element_type=jnp.float32) + ba, 0.0)

    # combine + ReLU
    sav = jnp.maximum(h + av, 0.0)

    # q head on the MXU: contract both last dims -> lane-dense (1, tb) row.
    q_row = lax.dot_general(wq, sav, (((1,), (1,)), ((), ())),
                            preferred_element_type=jnp.float32)
    q_row = q_row + bq_ref[0, 0]
    out_ref[...] = q_row[None].astype(out_ref.dtype)


def critic_forward(state, action, params, *, block_batch=2048):
    """state: (B, input_dims), action: (B, n_actions) -> (B, 1)."""
    batch, input_dims = state.shape
    n_actions = action.shape[1]
    fc1_dims = params["w1"].shape[1]
    fc2_dims = params["w2"].shape[1]
    sa_feat = input_dims + n_actions

    # --- batch tiling: big tiles; even step count when >1 so v7x megacore engages
    cap = max(8, (block_batch // 8) * 8)
    b8 = ((batch + 7) // 8) * 8
    if b8 <= cap:
        steps, tb = 1, b8
    else:
        steps = -(-b8 // cap)
        if steps % 2:
            steps += 1
        tb = ((-(-b8 // steps) + 7) // 8) * 8
    padded = steps * tb

    # one moving input: [state | action]; zero-padded rows are LN-safe
    sa = jnp.concatenate([state, action], axis=1)
    if padded != batch:
        sa = jnp.pad(sa, ((0, padded - batch), (0, 0)))

    # pack the 12 tiny parameter tensors into 4 VMEM refs + 1 SMEM scalar
    w1 = params["w1"]
    w2a = jnp.concatenate([params["w2"], params["wa"]], axis=0)
    ln1 = jnp.concatenate([params["b1"], params["g1"], params["beta1"]], axis=0)
    p2 = jnp.concatenate([params["b2"], params["g2"], params["beta2"],
                          params["ba"], params["wq"]], axis=0)
    bq = params["bq"].reshape(1, 1)

    def resident(arr):  # DMA'd once, VMEM-resident across the whole grid
        return pl.BlockSpec(arr.shape, lambda i: (0, 0))

    in_specs = [
        pl.BlockSpec((tb, sa_feat), lambda i: (i, 0)),          # moving tile
        resident(w1), resident(w2a), resident(ln1), resident(p2),
        pl.BlockSpec(memory_space=pltpu.MemorySpace.SMEM),      # bq scalar
    ]
    # lane-dense output: (steps, 1, tb) with (1, 1, tb) blocks
    out_specs = pl.BlockSpec((1, 1, tb), lambda i: (i, 0, 0))

    flops = 2 * padded * (input_dims * fc1_dims + fc1_dims * fc2_dims
                          + n_actions * fc2_dims + fc2_dims)
    param_bytes = 4 * int(w1.size + w2a.size + ln1.size + p2.size + 1)
    bytes_accessed = 4 * padded * (sa_feat + 1) + param_bytes
    cost = pl.CostEstimate(flops=flops, transcendentals=2 * padded,
                           bytes_accessed=bytes_accessed)

    kernel = functools.partial(critic_kernel,
                               input_dims=input_dims, fc1_dims=fc1_dims)

    out = pl.pallas_call(
        kernel,
        out_shape=jax.ShapeDtypeStruct((steps, 1, tb), jnp.float32),
        grid_spec=pltpu.PrefetchScalarGridSpec(
            num_scalar_prefetch=0,
            grid=(steps,),
            in_specs=in_specs,
            out_specs=out_specs,
        ),
        compiler_params=pltpu.CompilerParams(
            dimension_semantics=("parallel",)),
        cost_estimate=cost,
    )(sa, w1, w2a, ln1, p2, bq)

    return out.reshape(padded, 1)[:batch]


def init_params(key, input_dims, fc1_dims, fc2_dims, n_actions):
    """Deterministic init mirroring the PyTorch __init__ (shapes & ranges).

    nn.Linear weight is (out, in); we store its transpose (in, out).  The q
    head weight is stored as a (1, fc2_dims) row (lane-dense head contraction).
    """
    ks = jax.random.split(key, 8)
    f1 = 1.0 / np.sqrt(fc1_dims)
    f2 = 1.0 / np.sqrt(fc2_dims)
    f3 = 0.003
    fa = 1.0 / np.sqrt(n_actions)

    def u(k, shape, lim):
        return jax.random.uniform(k, shape, jnp.float32, minval=-lim, maxval=lim)

    return {
        "w1": u(ks[0], (input_dims, fc1_dims), f1),
        "b1": u(ks[1], (1, fc1_dims), f1),
        "g1": jnp.ones((1, fc1_dims), jnp.float32),
        "beta1": jnp.zeros((1, fc1_dims), jnp.float32),
        "w2": u(ks[2], (fc1_dims, fc2_dims), f2),
        "b2": u(ks[3], (1, fc2_dims), f2),
        "g2": jnp.ones((1, fc2_dims), jnp.float32),
        "beta2": jnp.zeros((1, fc2_dims), jnp.float32),
        "wa": u(ks[4], (n_actions, fc2_dims), fa),
        "ba": u(ks[5], (1, fc2_dims), fa),
        "wq": u(ks[6], (1, fc2_dims), f3),
        "bq": u(ks[7], (1, 1), f3),
    }


def reference_forward(state, action, p):
    """Plain-JAX reference (PyTorch-style two-pass LayerNorm) for correctness."""
    def ln(x, g, b):
        mu = jnp.mean(x, axis=-1, keepdims=True)
        var = jnp.mean((x - mu) ** 2, axis=-1, keepdims=True)
        return (x - mu) / jnp.sqrt(var + LN_EPS) * g + b

    h = jnp.maximum(ln(state @ p["w1"] + p["b1"], p["g1"], p["beta1"]), 0.0)
    h = ln(h @ p["w2"] + p["b2"], p["g2"], p["beta2"])
    av = jnp.maximum(action @ p["wa"] + p["ba"], 0.0)
    return jnp.maximum(h + av, 0.0) @ p["wq"].T + p["bq"]


if __name__ == "__main__":
    key = jax.random.PRNGKey(0)
    k_param, k_state, k_action = jax.random.split(key, 3)

    batch = 256        # small demo; block_batch=128 below forces 2 grid steps
    input_dims = 8
    fc1_dims = 32
    fc2_dims = 32
    n_actions = 4

    params = init_params(k_param, input_dims, fc1_dims, fc2_dims, n_actions)
    state = jax.random.normal(k_state, (batch, input_dims), jnp.float32)
    action = jax.random.normal(k_action, (batch, n_actions), jnp.float32)

    # Exercise the multi-step (even step count) tiling path; production use
    # would keep the default block_batch=2048.
    q = critic_forward(state, action, params, block_batch=128)
    q = jax.block_until_ready(q)

    q_ref = reference_forward(state, action, params)
    np.testing.assert_allclose(np.asarray(q), np.asarray(q_ref), rtol=1e-4, atol=1e-5)

    print("KERNEL_OK")
</pallas_src>

<mosaic_0001>
module attributes {stable_mosaic.version = 11 : i64} {
  func.func @critic_kernel(%arg0: i32, %arg1: memref<128x12xf32, #tpu.memory_space<vmem>>, %arg2: memref<8x32xf32, #tpu.memory_space<vmem>>, %arg3: memref<36x32xf32, #tpu.memory_space<vmem>>, %arg4: memref<3x32xf32, #tpu.memory_space<vmem>>, %arg5: memref<5x32xf32, #tpu.memory_space<vmem>>, %arg6: memref<1x1xf32, #tpu.memory_space<smem>>, %arg7: memref<1x1x128xf32, #tpu.memory_space<vmem>>) attributes {dimension_semantics = [#tpu.dimension_semantics<parallel>], iteration_bounds = array<i64: 2>, scalar_prefetch = 0 : i64, scratch_operands = 0 : i64, tpu.core_type = #tpu.core_type<tc>, window_params = [{transform_indices = @transform_0, window_bounds = array<i64: 128, 12>}, {pipeline_mode = #tpu.pipeline_mode<synchronous>, transform_indices = @transform_1, window_bounds = array<i64: 8, 32>}, {pipeline_mode = #tpu.pipeline_mode<synchronous>, transform_indices = @transform_2, window_bounds = array<i64: 36, 32>}, {pipeline_mode = #tpu.pipeline_mode<synchronous>, transform_indices = @transform_3, window_bounds = array<i64: 3, 32>}, {pipeline_mode = #tpu.pipeline_mode<synchronous>, transform_indices = @transform_4, window_bounds = array<i64: 5, 32>}, {transform_indices = @transform_5, window_bounds = array<i64: 1, 1>}, {transform_indices = @transform_6, window_bounds = array<i64: 1, 1, 128>}]} {
    %c0 = arith.constant 0 : index
    %c0_0 = arith.constant 0 : index
    %0 = vector.load %arg1[%c0, %c0_0] : memref<128x12xf32, #tpu.memory_space<vmem>>, vector<128x12xf32>
    %1 = vector.extract_strided_slice %0 {offsets = [0, 0], sizes = [128, 8], strides = [1, 1]} : vector<128x12xf32> to vector<128x8xf32>
    %2 = vector.extract_strided_slice %0 {offsets = [0, 8], sizes = [128, 4], strides = [1, 1]} : vector<128x12xf32> to vector<128x4xf32>
    %c0_1 = arith.constant 0 : index
    %c0_2 = arith.constant 0 : index
    %3 = vector.load %arg3[%c0_1, %c0_2] : memref<36x32xf32, #tpu.memory_space<vmem>>, vector<36x32xf32>
    %4 = vector.extract_strided_slice %3 {offsets = [0, 0], sizes = [32, 32], strides = [1, 1]} : vector<36x32xf32> to vector<32x32xf32>
    %5 = vector.extract_strided_slice %3 {offsets = [32, 0], sizes = [4, 32], strides = [1, 1]} : vector<36x32xf32> to vector<4x32xf32>
    %c0_3 = arith.constant 0 : index
    %c0_4 = arith.constant 0 : index
    %6 = vector.load %arg4[%c0_3, %c0_4] : memref<3x32xf32, #tpu.memory_space<vmem>>, vector<3x32xf32>
    %7 = vector.extract_strided_slice %6 {offsets = [0, 0], sizes = [1, 32], strides = [1, 1]} : vector<3x32xf32> to vector<1x32xf32>
    %8 = vector.extract_strided_slice %6 {offsets = [1, 0], sizes = [1, 32], strides = [1, 1]} : vector<3x32xf32> to vector<1x32xf32>
    %9 = vector.extract_strided_slice %6 {offsets = [2, 0], sizes = [1, 32], strides = [1, 1]} : vector<3x32xf32> to vector<1x32xf32>
    %c0_5 = arith.constant 0 : index
    %c0_6 = arith.constant 0 : index
    %10 = vector.load %arg5[%c0_5, %c0_6] : memref<5x32xf32, #tpu.memory_space<vmem>>, vector<5x32xf32>
    %11 = vector.extract_strided_slice %10 {offsets = [0, 0], sizes = [1, 32], strides = [1, 1]} : vector<5x32xf32> to vector<1x32xf32>
    %12 = vector.extract_strided_slice %10 {offsets = [1, 0], sizes = [1, 32], strides = [1, 1]} : vector<5x32xf32> to vector<1x32xf32>
    %13 = vector.extract_strided_slice %10 {offsets = [2, 0], sizes = [1, 32], strides = [1, 1]} : vector<5x32xf32> to vector<1x32xf32>
    %14 = vector.extract_strided_slice %10 {offsets = [3, 0], sizes = [1, 32], strides = [1, 1]} : vector<5x32xf32> to vector<1x32xf32>
    %15 = vector.extract_strided_slice %10 {offsets = [4, 0], sizes = [1, 32], strides = [1, 1]} : vector<5x32xf32> to vector<1x32xf32>
    %c0_7 = arith.constant 0 : index
    %c0_8 = arith.constant 0 : index
    %16 = vector.load %arg2[%c0_7, %c0_8] : memref<8x32xf32, #tpu.memory_space<vmem>>, vector<8x32xf32>
    %cst = arith.constant dense<0.000000e+00> : vector<128x32xf32>
    %17 = tpu.matmul %1, %16, %cst {dimension_numbers = #tpu.dot_dimension_numbers<[1], [0], [0], [1], [0, 0, 1, 1], [], []>} : vector<128x8xf32>, vector<8x32xf32>, vector<128x32xf32> -> vector<128x32xf32>
    %18 = vector.broadcast %7 : vector<1x32xf32> to vector<128x32xf32>
    %19 = arith.addf %17, %18 : vector<128x32xf32>
    %cst_9 = arith.constant dense<0.000000e+00> : vector<128xf32>
    %20 = vector.multi_reduction <add>, %19, %cst_9 [1] : vector<128x32xf32> to vector<128xf32>
    %21 = vector.shape_cast %20 : vector<128xf32> to vector<128x1xf32>
    %cst_10 = arith.constant 3.200000e+01 : f32
    %22 = vector.broadcast %cst_10 : f32 to vector<128x1xf32>
    %23 = arith.divf %21, %22 : vector<128x1xf32>
    %24 = vector.broadcast %23 : vector<128x1xf32> to vector<128x32xf32>
    %25 = arith.subf %19, %24 : vector<128x32xf32>
    %26 = arith.mulf %25, %25 : vector<128x32xf32>
    %cst_11 = arith.constant dense<0.000000e+00> : vector<128xf32>
    %27 = vector.multi_reduction <add>, %26, %cst_11 [1] : vector<128x32xf32> to vector<128xf32>
    %28 = vector.shape_cast %27 : vector<128xf32> to vector<128x1xf32>
    %cst_12 = arith.constant 3.200000e+01 : f32
    %29 = vector.broadcast %cst_12 : f32 to vector<128x1xf32>
    %30 = arith.divf %28, %29 : vector<128x1xf32>
    %cst_13 = arith.constant 9.99999974E-6 : f32
    %31 = vector.broadcast %cst_13 : f32 to vector<128x1xf32>
    %32 = arith.addf %30, %31 : vector<128x1xf32>
    %33 = math.rsqrt %32 : vector<128x1xf32>
    %34 = vector.broadcast %33 : vector<128x1xf32> to vector<128x32xf32>
    %35 = vector.broadcast %8 : vector<1x32xf32> to vector<128x32xf32>
    %36 = arith.mulf %34, %35 : vector<128x32xf32>
    %37 = arith.mulf %25, %36 : vector<128x32xf32>
    %38 = vector.broadcast %9 : vector<1x32xf32> to vector<128x32xf32>
    %39 = arith.addf %37, %38 : vector<128x32xf32>
    %cst_14 = arith.constant 0.000000e+00 : f32
    %40 = vector.broadcast %cst_14 : f32 to vector<128x32xf32>
    %41 = arith.maximumf %39, %40 : vector<128x32xf32>
    %cst_15 = arith.constant dense<0.000000e+00> : vector<128x32xf32>
    %42 = tpu.matmul %41, %4, %cst_15 {dimension_numbers = #tpu.dot_dimension_numbers<[1], [0], [0], [1], [0, 0, 1, 1], [], []>} : vector<128x32xf32>, vector<32x32xf32>, vector<128x32xf32> -> vector<128x32xf32>
    %43 = vector.broadcast %11 : vector<1x32xf32> to vector<128x32xf32>
    %44 = arith.addf %42, %43 : vector<128x32xf32>
    %cst_16 = arith.constant dense<0.000000e+00> : vector<128xf32>
    %45 = vector.multi_reduction <add>, %44, %cst_16 [1] : vector<128x32xf32> to vector<128xf32>
    %46 = vector.shape_cast %45 : vector<128xf32> to vector<128x1xf32>
    %cst_17 = arith.constant 3.200000e+01 : f32
    %47 = vector.broadcast %cst_17 : f32 to vector<128x1xf32>
    %48 = arith.divf %46, %47 : vector<128x1xf32>
    %49 = vector.broadcast %48 : vector<128x1xf32> to vector<128x32xf32>
    %50 = arith.subf %44, %49 : vector<128x32xf32>
    %51 = arith.mulf %50, %50 : vector<128x32xf32>
    %cst_18 = arith.constant dense<0.000000e+00> : vector<128xf32>
    %52 = vector.multi_reduction <add>, %51, %cst_18 [1] : vector<128x32xf32> to vector<128xf32>
    %53 = vector.shape_cast %52 : vector<128xf32> to vector<128x1xf32>
    %cst_19 = arith.constant 3.200000e+01 : f32
    %54 = vector.broadcast %cst_19 : f32 to vector<128x1xf32>
    %55 = arith.divf %53, %54 : vector<128x1xf32>
    %cst_20 = arith.constant 9.99999974E-6 : f32
    %56 = vector.broadcast %cst_20 : f32 to vector<128x1xf32>
    %57 = arith.addf %55, %56 : vector<128x1xf32>
    %58 = math.rsqrt %57 : vector<128x1xf32>
    %59 = vector.broadcast %58 : vector<128x1xf32> to vector<128x32xf32>
    %60 = vector.broadcast %12 : vector<1x32xf32> to vector<128x32xf32>
    %61 = arith.mulf %59, %60 : vector<128x32xf32>
    %62 = arith.mulf %50, %61 : vector<128x32xf32>
    %63 = vector.broadcast %13 : vector<1x32xf32> to vector<128x32xf32>
    %64 = arith.addf %62, %63 : vector<128x32xf32>
    %cst_21 = arith.constant dense<0.000000e+00> : vector<128x32xf32>
    %65 = tpu.matmul %2, %5, %cst_21 {dimension_numbers = #tpu.dot_dimension_numbers<[1], [0], [0], [1], [0, 0, 1, 1], [], []>} : vector<128x4xf32>, vector<4x32xf32>, vector<128x32xf32> -> vector<128x32xf32>
    %66 = vector.broadcast %14 : vector<1x32xf32> to vector<128x32xf32>
    %67 = arith.addf %65, %66 : vector<128x32xf32>
    %cst_22 = arith.constant 0.000000e+00 : f32
    %68 = vector.broadcast %cst_22 : f32 to vector<128x32xf32>
    %69 = arith.maximumf %67, %68 : vector<128x32xf32>
    %70 = arith.addf %64, %69 : vector<128x32xf32>
    %cst_23 = arith.constant 0.000000e+00 : f32
    %71 = vector.broadcast %cst_23 : f32 to vector<128x32xf32>
    %72 = arith.maximumf %70, %71 : vector<128x32xf32>
    %cst_24 = arith.constant dense<0.000000e+00> : vector<1x128xf32>
    %73 = tpu.matmul %15, %72, %cst_24 {dimension_numbers = #tpu.dot_dimension_numbers<[1], [1], [0], [0], [0, 0, 1, 0], [], []>} : vector<1x32xf32>, vector<128x32xf32>, vector<1x128xf32> -> vector<1x128xf32>
    %c0_25 = arith.constant 0 : index
    %c0_26 = arith.constant 0 : index
    %74 = memref.load %arg6[%c0_25, %c0_26] : memref<1x1xf32, #tpu.memory_space<smem>>
    %75 = vector.broadcast %74 : f32 to vector<1x128xf32>
    %76 = arith.addf %73, %75 : vector<1x128xf32>
    %77 = vector.shape_cast %76 : vector<1x128xf32> to vector<1x1x128xf32>
    %c0_27 = arith.constant 0 : index
    %c0_28 = arith.constant 0 : index
    %c0_29 = arith.constant 0 : index
    %78 = vector.load %arg7[%c0_27, %c0_28, %c0_29] : memref<1x1x128xf32, #tpu.memory_space<vmem>>, vector<1x1x128xf32>
    tpu.vector_store %arg7[%c0_27, %c0_28, %c0_29], %77 {strides = array<i32>} : memref<1x1x128xf32, #tpu.memory_space<vmem>>, vector<1x1x128xf32>,
    return
  }
  func.func @transform_0(%arg0: i32) -> (i32, i32) {
    %c0_i32 = arith.constant 0 : i32
    %c0_i32_0 = arith.constant 0 : i32
    return %arg0, %c0_i32 : i32, i32
  }
  func.func @transform_1(%arg0: i32) -> (i32, i32) {
    %c0_i32 = arith.constant 0 : i32
    %c0_i32_0 = arith.constant 0 : i32
    %c0_i32_1 = arith.constant 0 : i32
    return %c0_i32, %c0_i32_0 : i32, i32
  }
  func.func @transform_2(%arg0: i32) -> (i32, i32) {
    %c0_i32 = arith.constant 0 : i32
    %c0_i32_0 = arith.constant 0 : i32
    %c0_i32_1 = arith.constant 0 : i32
    return %c0_i32, %c0_i32_0 : i32, i32
  }
  func.func @transform_3(%arg0: i32) -> (i32, i32) {
    %c0_i32 = arith.constant 0 : i32
    %c0_i32_0 = arith.constant 0 : i32
    %c0_i32_1 = arith.constant 0 : i32
    return %c0_i32, %c0_i32_0 : i32, i32
  }
  func.func @transform_4(%arg0: i32) -> (i32, i32) {
    %c0_i32 = arith.constant 0 : i32
    %c0_i32_0 = arith.constant 0 : i32
    %c0_i32_1 = arith.constant 0 : i32
    return %c0_i32, %c0_i32_0 : i32, i32
  }
  func.func @transform_5(%arg0: i32) -> (i32, i32) {
    %c0_i32 = arith.constant 0 : i32
    %c0_i32_0 = arith.constant 0 : i32
    %c0_i32_1 = arith.constant 0 : i32
    return %c0_i32, %c0_i32_0 : i32, i32
  }
  func.func @transform_6(%arg0: i32) -> (i32, i32, i32) {
    %c0_i32 = arith.constant 0 : i32
    %c0_i32_0 = arith.constant 0 : i32
    %c0_i32_1 = arith.constant 0 : i32
    return %arg0, %c0_i32, %c0_i32_0 : i32, i32, i32
  }
}

</mosaic_0001>

<llo_original>
// kernel: tpu_custom_call.1
$region0: #{tpu_custom_call.1}
  #allocation0 [shape = 'u32[]', space=smem, size = 0x4, offset = 0x4, fixed_abs, tag = 'smem constant byte address 0x4 - core index']
  #allocation1 [shape = 'u32[144,128]{1,0:T(1,128)}', space=vmem, size = 0x12000, scoped, tag = 'internal scratch']
  #allocation2 [shape = 'f32[1,1]{1,0:T(1,128)S(6)}', space=smem, size = 0x200, scoped, tag = 'scoped memory for tpu_custom_call.1']
  %s0 = inlined_call_operand.vmem [shape: f32[256,12], index: 0, kind: input, shape index: {}]
  %s1 = inlined_call_operand.vmem [shape: f32[8,32], index: 1, kind: input, shape index: {}]
  %s2 = inlined_call_operand.vmem [shape: f32[36,32], index: 2, kind: input, shape index: {}]
  %s3 = inlined_call_operand.vmem [shape: f32[3,32], index: 3, kind: input, shape index: {}]
  %s4 = inlined_call_operand.vmem [shape: f32[5,32], index: 4, kind: input, shape index: {}]
  %s5 = inlined_call_operand.<no memory space> [shape: f32[1,1], index: 5, kind: input, shape index: {}]
  %s6 = inlined_call_operand.hbm [shape: f32[2,1,128], index: 6, kind: output, shape index: {}]
  %s7 = sld [smem:[#allocation0]]
  $region57: #{tpu_custom_call.1} parent=0
    _
  %s9 = ssub.s32 1, %s7
  %s10 = scalar_select 0, %s9, %s7
  %11 = sst [smem:[#allocation2]] %s5
  $region1: #{tpu_custom_call.1} parent=0
    #allocation3 [shape = 'u8[1024]{0}', space=vmem, size = 0x400, scoped, tag = 'output window, operand 0']
    #allocation4 [shape = 's32[2]{0}', space=sflag, size = 0x8, scoped, tag = 'scoped memory for tpu_custom_call.1']
    %12 = vsyncpa [#allocation4], 0
    %s13 = scalar_lea.sflag [#allocation4], 1
    %14 = vsyncpa %s13, 0
    loop: start=0, step=1, limit=4
    $region2: #{tpu_custom_call.1} parent=1 // loop_pre_header
      _
    $region3: #{tpu_custom_call.1} parent=1 // loop_header
      %s16 = sphi 0, %s20
      %p17 = scmp.ge.s32.totalorder %s16, 4
      %s26 = sphi 0, %s28
      %s29 = sphi 0, %s26
      %s30 = sphi 0, %s29
      %s46 = sphi 0, %s30
      %s50 = sphi 0, %s50
      %s52 = sphi 0, %s50
      %s53 = sphi 0, %s52
      %s67 = sphi 0, %s53
      %s71 = sphi 0, %s71
      %s73 = sphi 0, %s71
      %s74 = sphi 0, %s73
      %s88 = sphi 0, %s74
      %s92 = sphi 0, %s92
      %s94 = sphi 0, %s92
      %s95 = sphi 0, %s94
      %s109 = sphi 0, %s95
      %s113 = sphi 0, %s113
      %s115 = sphi 0, %s113
      %s116 = sphi 0, %s115
      %s130 = sphi 0, %s116
      %s134 = sphi 0, %s134
      %s136 = sphi 0, %s134
      %s137 = sphi 0, %s136
      %s151 = sphi 0, %s137
      %s157 = sphi 0, %s159
      %s160 = sphi 0, %s157
      %s161 = sphi 0, %s160
      %s177 = sphi 0, %s161
    $region4: #{tpu_custom_call.1} parent=1 // loop_header_branch
      %19 = sbr.rel (%p17) target = $region8
    $region5: #{tpu_custom_call.1} parent=1 // loop_body
      %s21 = ssub.s32 %s16, 1
      %s22 = ssub.s32 %s16, 2
      %s23 = sadd.s32 %s16, 1
      %s24 = ssub.s32 %s16, %s23
      %p25 = scmp.eq.s32.totalorder %s24, 0
      %s27 = sadd.s32 %s26, 1
      %s28 = scalar_select %p25, %s26, %s27
      %p31 = pneg %p25
      %p32 = scmp.eq.s32.totalorder %s16, 1
      %p33 = por %p31, %p32
      %p34 = scmp.ne.s32.totalorder %s26, %s29
      %p35 = scmp.eq.s32.totalorder %s16, 0
      %p36 = por %p34, %p35
      %p37 = scmp.ne.s32.totalorder %s26, %s29
      %p38 = scmp.eq.s32.totalorder %s21, 1
      %p39 = por %p37, %p38
      %p40 = scmp.ne.s32.totalorder %s29, %s30
      %p41 = scmp.eq.s32.totalorder %s21, 0
      %p42 = por %p40, %p41
      %p43 = scmp.ne.s32.totalorder %s29, %s30
      %p44 = scmp.eq.s32.totalorder %s22, 1
      %p45 = por %p43, %p44
      %p47 = scmp.ne.s32.totalorder %s30, %s46
      %p48 = scmp.eq.s32.totalorder %s22, 0
      %p49 = por %p47, %p48
      %s51 = sadd.s32 %s50, 1
      %p54 = scmp.eq.s32.totalorder %s16, 1
      %p55 = scmp.ne.s32.totalorder %s50, %s52
      %p56 = scmp.eq.s32.totalorder %s16, 0
      %p57 = por %p55, %p56
      %p58 = scmp.ne.s32.totalorder %s50, %s52
      %p59 = scmp.eq.s32.totalorder %s21, 1
      %p60 = por %p58, %p59
      %p61 = scmp.ne.s32.totalorder %s52, %s53
      %p62 = scmp.eq.s32.totalorder %s21, 0
      %p63 = por %p61, %p62
      %p64 = scmp.ne.s32.totalorder %s52, %s53
      %p65 = scmp.eq.s32.totalorder %s22, 1
      %p66 = por %p64, %p65
      %p68 = scmp.ne.s32.totalorder %s53, %s67
      %p69 = scmp.eq.s32.totalorder %s22, 0
      %p70 = por %p68, %p69
      %s72 = sadd.s32 %s71, 1
      %p75 = scmp.eq.s32.totalorder %s16, 1
      %p76 = scmp.ne.s32.totalorder %s71, %s73
      %p77 = scmp.eq.s32.totalorder %s16, 0
      %p78 = por %p76, %p77
      %p79 = scmp.ne.s32.totalorder %s71, %s73
      %p80 = scmp.eq.s32.totalorder %s21, 1
      %p81 = por %p79, %p80
      %p82 = scmp.ne.s32.totalorder %s73, %s74
      %p83 = scmp.eq.s32.totalorder %s21, 0
      %p84 = por %p82, %p83
      %p85 = scmp.ne.s32.totalorder %s73, %s74
      %p86 = scmp.eq.s32.totalorder %s22, 1
      %p87 = por %p85, %p86
      %p89 = scmp.ne.s32.totalorder %s74, %s88
      %p90 = scmp.eq.s32.totalorder %s22, 0
      %p91 = por %p89, %p90
      %s93 = sadd.s32 %s92, 1
      %p96 = scmp.eq.s32.totalorder %s16, 1
      %p97 = scmp.ne.s32.totalorder %s92, %s94
      %p98 = scmp.eq.s32.totalorder %s16, 0
      %p99 = por %p97, %p98
      %p100 = scmp.ne.s32.totalorder %s92, %s94
      %p101 = scmp.eq.s32.totalorder %s21, 1
      %p102 = por %p100, %p101
      %p103 = scmp.ne.s32.totalorder %s94, %s95
      %p104 = scmp.eq.s32.totalorder %s21, 0
      %p105 = por %p103, %p104
      %p106 = scmp.ne.s32.totalorder %s94, %s95
      %p107 = scmp.eq.s32.totalorder %s22, 1
      %p108 = por %p106, %p107
      %p110 = scmp.ne.s32.totalorder %s95, %s109
      %p111 = scmp.eq.s32.totalorder %s22, 0
      %p112 = por %p110, %p111
      %s114 = sadd.s32 %s113, 1
      %p117 = scmp.eq.s32.totalorder %s16, 1
      %p118 = scmp.ne.s32.totalorder %s113, %s115
      %p119 = scmp.eq.s32.totalorder %s16, 0
      %p120 = por %p118, %p119
      %p121 = scmp.ne.s32.totalorder %s113, %s115
      %p122 = scmp.eq.s32.totalorder %s21, 1
      %p123 = por %p121, %p122
      %p124 = scmp.ne.s32.totalorder %s115, %s116
      %p125 = scmp.eq.s32.totalorder %s21, 0
      %p126 = por %p124, %p125
      %p127 = scmp.ne.s32.totalorder %s115, %s116
      %p128 = scmp.eq.s32.totalorder %s22, 1
      %p129 = por %p127, %p128
      %p131 = scmp.ne.s32.totalorder %s116, %s130
      %p132 = scmp.eq.s32.totalorder %s22, 0
      %p133 = por %p131, %p132
      %s135 = sadd.s32 %s134, 1
      %p138 = scmp.eq.s32.totalorder %s16, 1
      %p139 = scmp.ne.s32.totalorder %s134, %s136
      %p140 = scmp.eq.s32.totalorder %s16, 0
      %p141 = por %p139, %p140
      %p142 = scmp.ne.s32.totalorder %s134, %s136
      %p143 = scmp.eq.s32.totalorder %s21, 1
      %p144 = por %p142, %p143
      %p145 = scmp.ne.s32.totalorder %s136, %s137
      %p146 = scmp.eq.s32.totalorder %s21, 0
      %p147 = por %p145, %p146
      %p148 = scmp.ne.s32.totalorder %s136, %s137
      %p149 = scmp.eq.s32.totalorder %s22, 1
      %p150 = por %p148, %p149
      %p152 = scmp.ne.s32.totalorder %s137, %s151
      %p153 = scmp.eq.s32.totalorder %s22, 0
      %p154 = por %p152, %p153
      %s155 = ssub.s32 %s16, %s23
      %p156 = scmp.eq.s32.totalorder %s155, 0
      %s158 = sadd.s32 %s157, 1
      %s159 = scalar_select %p156, %s157, %s158
      %p162 = pneg %p156
      %p163 = scmp.eq.s32.totalorder %s16, 1
      %p164 = por %p162, %p163
      %p165 = scmp.ne.s32.totalorder %s157, %s160
      %p166 = scmp.eq.s32.totalorder %s16, 0
      %p167 = por %p165, %p166
      %p168 = scmp.ne.s32.totalorder %s157, %s160
      %p169 = scmp.eq.s32.totalorder %s21, 1
      %p170 = por %p168, %p169
      %p171 = scmp.ne.s32.totalorder %s160, %s161
      %p172 = scmp.eq.s32.totalorder %s21, 0
      %p173 = por %p171, %p172
      %p174 = scmp.ne.s32.totalorder %s160, %s161
      %p175 = scmp.eq.s32.totalorder %s22, 1
      %p176 = por %p174, %p175
      %p178 = scmp.ne.s32.totalorder %s161, %s177
      %p179 = scmp.eq.s32.totalorder %s22, 0
      %p180 = por %p178, %p179
      %p181 = scmp.le.s32.totalorder 1, %s16
      %p182 = scmp.lt.s32.totalorder %s16, 3
      %p183 = pnand %p181, %p182
      %p184 = pneg %p183
      // Predicated region
      $region9: #{tpu_custom_call.1} parent=5 // pred_check
        _
      $region10: #{tpu_custom_call.1} parent=5 // pred_check_branch
        %186 = sbr.rel (%p183) target = $region12
      $region11: #{tpu_custom_call.1} parent=5 // pred_region
        %s187 = ssub.s32 %s16, 1
        // Predicated region
        $region13: #{tpu_custom_call.1} parent=11 // pred_check
          %p188 = pneg %p63
        $region14: #{tpu_custom_call.1} parent=11 // pred_check_branch
          %190 = sbr.rel (%p188) target = $region16
        $region15: #{tpu_custom_call.1} parent=11 // pred_region
          _
        $region16: #{tpu_custom_call.1} parent=11 // pred_fallthru
          _
        // Predicated region
        $region17: #{tpu_custom_call.1} parent=11 // pred_check
          %p191 = pneg %p84
        $region18: #{tpu_custom_call.1} parent=11 // pred_check_branch
          %193 = sbr.rel (%p191) target = $region20
        $region19: #{tpu_custom_call.1} parent=11 // pred_region
          _
        $region20: #{tpu_custom_call.1} parent=11 // pred_fallthru
          _
        // Predicated region
        $region21: #{tpu_custom_call.1} parent=11 // pred_check
          %p194 = pneg %p105
        $region22: #{tpu_custom_call.1} parent=11 // pred_check_branch
          %196 = sbr.rel (%p194) target = $region24
        $region23: #{tpu_custom_call.1} parent=11 // pred_region
          _
        $region24: #{tpu_custom_call.1} parent=11 // pred_fallthru
          _
        // Predicated region
        $region25: #{tpu_custom_call.1} parent=11 // pred_check
          %p197 = pneg %p126
        $region26: #{tpu_custom_call.1} parent=11 // pred_check_branch
          %199 = sbr.rel (%p197) target = $region28
        $region27: #{tpu_custom_call.1} parent=11 // pred_region
          _
        $region28: #{tpu_custom_call.1} parent=11 // pred_fallthru
          _
        // Predicated region
        $region29: #{tpu_custom_call.1} parent=11 // pred_check
          %p200 = pneg %p147
        $region30: #{tpu_custom_call.1} parent=11 // pred_check_branch
          %202 = sbr.rel (%p200) target = $region32
        $region31: #{tpu_custom_call.1} parent=11 // pred_region
          _
        $region32: #{tpu_custom_call.1} parent=11 // pred_fallthru
          _
      $region12: #{tpu_custom_call.1} parent=5 // pred_fallthru
        _
      %p203 = scmp.lt.s32.totalorder %s16, 2
      // Predicated region
      $region33: #{tpu_custom_call.1} parent=5 // pred_check
        %p204 = pneg %p203
      $region34: #{tpu_custom_call.1} parent=5 // pred_check_branch
        %206 = sbr.rel (%p204) target = $region36
      $region35: #{tpu_custom_call.1} parent=5 // pred_region
        // Predicated region
        $region37: #{tpu_custom_call.1} parent=35 // pred_check
          %p207 = pneg %p36
        $region38: #{tpu_custom_call.1} parent=35 // pred_check_branch
          %209 = sbr.rel (%p207) target = $region40
        $region39: #{tpu_custom_call.1} parent=35 // pred_region
          %s210 = smul.u32 16, %s16
          %p211 = scmp.lt.s32.totalorder %s210, 31
          %s212 = scalar_select %p211, %s210, 31
          %s213 = smul.addr %s212, 8
          %s214 = scalar_lea.vmem %s0, %s213
          %s215 = smul.u32 16, %s16
        $region40: #{tpu_custom_call.1} parent=35 // pred_fallthru
          _
      $region36: #{tpu_custom_call.1} parent=5 // pred_fallthru
        _
      %p216 = scmp.le.s32.totalorder 1, %s16
      %p217 = scmp.lt.s32.totalorder %s16, 3
      %p218 = pnand %p216, %p217
      %p219 = pneg %p218
      // Predicated region
      $region41: #{tpu_custom_call.1} parent=5 // pred_check
        _
      $region42: #{tpu_custom_call.1} parent=5 // pred_check_branch
        %221 = sbr.rel (%p218) target = $region44
      $region43: #{tpu_custom_call.1} parent=5 // pred_region
        %s222 = ssub.s32 %s16, 1
        %s223 = smul.u32 16, %s21
        %p224 = scmp.lt.s32.totalorder %s223, 31
        %s225 = scalar_select %p224, %s223, 31
        %s226 = smul.addr %s225, 8
        %s227 = scalar_lea.vmem %s0, %s226
        %p228 = pneg %p42
        %p229 = pneg %p39
        %p230 = pneg %p63
        %p231 = pneg %p60
        %p232 = pneg %p84
        %p233 = pneg %p81
        %p234 = pneg %p105
        %p235 = pneg %p102
        %p236 = pneg %p126
        %p237 = pneg %p123
        %p238 = pneg %p147
        %p239 = pneg %p144
        %p240 = pneg %p173
        %p241 = pneg %p170
        %s242 = sand.u32 %s160, 1
        %s243 = scalar_lea.sflag [#allocation4], %s242
        %s244 = sand.u32 %s160, 1
        %s245 = scalar_lea.vmem [#allocation3], %s244
        %s246 = smul.u32 16, %s21
        %p247 = scmp.lt.s32.totalorder %s246, 31
        %s248 = scalar_select %p247, %s246, 31
        %s249 = smul.addr %s248, 8
        %s250 = scalar_lea.vmem %s0, %s249
        %s251 = smul.u32 16, %s21
        %v252 = vld [vmem:[%s250] sm:$0xff]
        %v253 = vld [vmem:[%s250 + $0x8] sm:$0xff]
        %v254 = vld [vmem:[%s250 + $0x10] sm:$0xff]
        %v255 = vld [vmem:[%s250 + $0x18] sm:$0xff]
        %v256 = vld [vmem:[%s250 + $0x20] sm:$0xff]
        %v257 = vld [vmem:[%s250 + $0x28] sm:$0xff]
        %v258 = vld [vmem:[%s250 + $0x30] sm:$0xff]
        %v259 = vld [vmem:[%s250 + $0x38] sm:$0xff]
        %v260 = vld [vmem:[%s250 + $0x40] sm:$0xff]
        %v261 = vld [vmem:[%s250 + $0x48] sm:$0xff]
        %v262 = vld [vmem:[%s250 + $0x50] sm:$0xff]
        %v263 = vld [vmem:[%s250 + $0x58] sm:$0xff]
        %v264 = vld [vmem:[%s250 + $0x60] sm:$0xff]
        %v265 = vld [vmem:[%s250 + $0x68] sm:$0xff]
        %v266 = vld [vmem:[%s250 + $0x70] sm:$0xff]
        %v267 = vld [vmem:[%s250 + $0x78] sm:$0xff]
        %v268 = vld [vmem:[%s2] sm:$0xff]
        %v269 = vld [vmem:[%s2 + $0x8] sm:$0xff]
        %v270 = vld [vmem:[%s2 + $0x10] sm:$0xff]
        %v271 = vld [vmem:[%s2 + $0x18] sm:$0xff]
        %v272 = vld [vmem:[%s2 + $0x20] sm:$0xf]
        %v273 = vld [vmem:[%s3] sm:$0x7]
        %v274 = vld [vmem:[%s4] sm:$0x1f]
        %v275 = vld [vmem:[%s1] sm:$0xff]
        %v276 = vlaneseq
        %v277 = vshrl.u32 %v276, 7
        %v278 = vsub.s32 0, %v277
        %v279 = vrot.slane %v273, %v278
        %vm280 = vcmask 64512
        %v282 = vsel %vm280, %v252, 0
        %v285 = vsel %vm280, %v253, 0
        %v288 = vsel %vm280, %v254, 0
        %v291 = vsel %vm280, %v255, 0
        %v294 = vsel %vm280, %v256, 0
        %v297 = vsel %vm280, %v257, 0
        %v300 = vsel %vm280, %v258, 0
        %v303 = vsel %vm280, %v259, 0
        %v306 = vsel %vm280, %v260, 0
        %v309 = vsel %vm280, %v261, 0
        %v312 = vsel %vm280, %v262, 0
        %v315 = vsel %vm280, %v263, 0
        %v318 = vsel %vm280, %v264, 0
        %v321 = vsel %vm280, %v265, 0
        %v324 = vsel %vm280, %v266, 0
        %v327 = vsel %vm280, %v267, 0
        %329 = vmatprep.subr.mxu0 0.0
        %330 = vmatpush1.msra.mxu0 %v275
        %331 = vmatprep.subr.mxu0 0.0
        %332 = vmatpush1.msra.mxu0 0.0
        %333 = vmatprep.subr.mxu0 0.0
        %334 = vmatpush1.msra.mxu0 0.0
        %335 = vmatprep.subr.mxu0 0.0
        %336 = vmatpush1.msra.mxu0 0.0
        %337 = vmatprep.subr.mxu0 0.0
        %338 = vmatpush1.msra.mxu0 0.0
        %339 = vmatprep.subr.mxu0 0.0
        %340 = vmatpush1.msra.mxu0 0.0
        %341 = vmatprep.subr.mxu0 0.0
        %342 = vmatpush1.msra.mxu0 0.0
        %343 = vmatprep.subr.mxu0 0.0
        %344 = vmatpush1.msra.mxu0 0.0
        %345 = vmatprep.subr.mxu0 0.0
        %346 = vmatpush1.msra.mxu0 0.0
        %347 = vmatprep.subr.mxu0 0.0
        %348 = vmatpush1.msra.mxu0 0.0
        %349 = vmatprep.subr.mxu0 0.0
        %350 = vmatpush1.msra.mxu0 0.0
        %351 = vmatprep.subr.mxu0 0.0
        %352 = vmatpush1.msra.mxu0 0.0
        %353 = vmatprep.subr.mxu0 0.0
        %354 = vmatpush1.msra.mxu0 0.0
        %355 = vmatprep.subr.mxu0 0.0
        %356 = vmatpush1.msra.mxu0 0.0
        %357 = vmatprep.subr.mxu0 0.0
        %358 = vmatpush1.msra.mxu0 0.0
        %359 = vmatprep.subr.mxu0 0.0
        %360 = vmatpush1.msra.mxu0 0.0
        %361 = vmatprep.subr.mxu0 0.0
        %362 = vmatpush1.msra.mxu0 0.0
        %363 = vmatprep.subr.mxu0 0.0
        %364 = vmatpush1.msra.mxu0 0.0
        %365 = vmatprep.subr.mxu0 0.0
        %366 = vmatpush1.msra.mxu0 0.0
        %367 = vmatprep.subr.mxu0 0.0
        %368 = vmatpush1.msra.mxu0 0.0
        %369 = vmatprep.subr.mxu0 0.0
        %370 = vmatpush1.msra.mxu0 0.0
        %371 = vmatprep.subr.mxu0 0.0
        %372 = vmatpush1.msra.mxu0 0.0
        %373 = vmatprep.subr.mxu0 0.0
        %374 = vmatpush1.msra.mxu0 0.0
        %375 = vmatprep.subr.mxu0 0.0
        %376 = vmatpush1.msra.mxu0 0.0
        %377 = vmatprep.subr.mxu0 0.0
        %378 = vmatpush1.msra.mxu0 0.0
        %379 = vmatprep.subr.mxu0 0.0
        %380 = vmatpush1.msra.mxu0 0.0
        %381 = vmatprep.subr.mxu0 0.0
        %382 = vmatpush1.msra.mxu0 0.0
        %383 = vmatprep.subr.mxu0 0.0
        %384 = vmatpush1.msra.mxu0 0.0
        %385 = vmatprep.subr.mxu0 0.0
        %386 = vmatpush1.msra.mxu0 0.0
        %387 = vmatprep.subr.mxu0 0.0
        %388 = vmatpush1.msra.mxu0 0.0
        %389 = vmatprep.subr.mxu0 0.0
        %390 = vmatpush1.msra.mxu0 0.0
        %391 = vmatprep.subr.mxu0 0.0
        %392 = vmatpush1.msra.mxu0 0.0
        %393 = vmatprep.mubr.f32.mxu0 0.0
        %394 = vmatmul.mubr.f32.gmra.mrb[0].mxu0 %v282
        %v395 = vpop.f32.mrb[0].mxu0
        %v396 = vadd.f32 %v279, %v395
        %v397 = vpop.f32.mrb[0].mxu0
        %398 = vmatprep.mubr.f32.mxu0 0.0
        %399 = vmatmul.mubr.f32.gmra.mrb[0].mxu0 %v285
        %v400 = vpop.f32.mrb[0].mxu0
        %v401 = vadd.f32 %v279, %v400
        %v402 = vpop.f32.mrb[0].mxu0
        %403 = vmatprep.mubr.f32.mxu0 0.0
        %404 = vmatmul.mubr.f32.gmra.mrb[0].mxu0 %v288
        %v405 = vpop.f32.mrb[0].mxu0
        %v406 = vadd.f32 %v279, %v405
        %v407 = vpop.f32.mrb[0].mxu0
        %408 = vmatprep.mubr.f32.mxu0 0.0
        %409 = vmatmul.mubr.f32.gmra.mrb[0].mxu0 %v291
        %v410 = vpop.f32.mrb[0].mxu0
        %v411 = vadd.f32 %v279, %v410
        %v412 = vpop.f32.mrb[0].mxu0
        %413 = vmatprep.mubr.f32.mxu0 0.0
        %414 = vmatmul.mubr.f32.gmra.mrb[0].mxu0 %v294
        %v415 = vpop.f32.mrb[0].mxu0
        %v416 = vadd.f32 %v279, %v415
        %v417 = vpop.f32.mrb[0].mxu0
        %418 = vmatprep.mubr.f32.mxu0 0.0
        %419 = vmatmul.mubr.f32.gmra.mrb[0].mxu0 %v297
        %v420 = vpop.f32.mrb[0].mxu0
        %v421 = vadd.f32 %v279, %v420
        %v422 = vpop.f32.mrb[0].mxu0
        %423 = vmatprep.mubr.f32.mxu0 0.0
        %424 = vmatmul.mubr.f32.gmra.mrb[0].mxu0 %v300
        %v425 = vpop.f32.mrb[0].mxu0
        %v426 = vadd.f32 %v279, %v425
        %v427 = vpop.f32.mrb[0].mxu0
        %428 = vmatprep.mubr.f32.mxu0 0.0
        %429 = vmatmul.mubr.f32.gmra.mrb[0].mxu0 %v303
        %v430 = vpop.f32.mrb[0].mxu0
        %v431 = vadd.f32 %v279, %v430
        %v432 = vpop.f32.mrb[0].mxu0
        %433 = vmatprep.mubr.f32.mxu0 0.0
        %434 = vmatmul.mubr.f32.gmra.mrb[0].mxu0 %v306
        %v435 = vpop.f32.mrb[0].mxu0
        %v436 = vadd.f32 %v279, %v435
        %v437 = vpop.f32.mrb[0].mxu0
        %438 = vmatprep.mubr.f32.mxu0 0.0
        %439 = vmatmul.mubr.f32.gmra.mrb[0].mxu0 %v309
        %v440 = vpop.f32.mrb[0].mxu0
        %v441 = vadd.f32 %v279, %v440
        %v442 = vpop.f32.mrb[0].mxu0
        %443 = vmatprep.mubr.f32.mxu0 0.0
        %444 = vmatmul.mubr.f32.gmra.mrb[0].mxu0 %v312
        %v445 = vpop.f32.mrb[0].mxu0
        %v446 = vadd.f32 %v279, %v445
        %v447 = vpop.f32.mrb[0].mxu0
        %448 = vmatprep.mubr.f32.mxu0 0.0
        %449 = vmatmul.mubr.f32.gmra.mrb[0].mxu0 %v315
        %v450 = vpop.f32.mrb[0].mxu0
        %v451 = vadd.f32 %v279, %v450
        %v452 = vpop.f32.mrb[0].mxu0
        %453 = vmatprep.mubr.f32.mxu0 0.0
        %454 = vmatmul.mubr.f32.gmra.mrb[0].mxu0 %v318
        %v455 = vpop.f32.mrb[0].mxu0
        %v456 = vadd.f32 %v279, %v455
        %v457 = vpop.f32.mrb[0].mxu0
        %458 = vmatprep.mubr.f32.mxu0 0.0
        %459 = vmatmul.mubr.f32.gmra.mrb[0].mxu0 %v321
        %v460 = vpop.f32.mrb[0].mxu0
        %v461 = vadd.f32 %v279, %v460
        %v462 = vpop.f32.mrb[0].mxu0
        %463 = vmatprep.mubr.f32.mxu0 0.0
        %464 = vmatmul.mubr.f32.gmra.mrb[0].mxu0 %v324
        %v465 = vpop.f32.mrb[0].mxu0
        %v466 = vadd.f32 %v279, %v465
        %v467 = vpop.f32.mrb[0].mxu0
        %468 = vmatprep.mubr.f32.mxu0 0.0
        %469 = vmatmul.mubr.f32.gmra.mrb[0].mxu0 %v327
        %v470 = vpop.f32.mrb[0].mxu0
        %v471 = vadd.f32 %v279, %v470
        %v472 = vpop.f32.mrb[0].mxu0
        %473 = vdwg.mxu0
        %vm474 = vcmask 261120
        %v475 = vsel %vm474, %v396, 0.0
        %476 = vadd.xlane.f32.xlu0 %v475
        %v477 = vpop.xlane.xlu0 %476
        %v478 = vsel %vm474, %v401, 0.0
        %479 = vadd.xlane.f32.xlu0 %v478
        %v480 = vpop.xlane.xlu0 %479
        %v481 = vsel %vm474, %v406, 0.0
        %482 = vadd.xlane.f32.xlu0 %v481
        %v483 = vpop.xlane.xlu0 %482
        %v484 = vsel %vm474, %v411, 0.0
        %485 = vadd.xlane.f32.xlu0 %v484
        %v486 = vpop.xlane.xlu0 %485
        %v487 = vsel %vm474, %v416, 0.0
        %488 = vadd.xlane.f32.xlu0 %v487
        %v489 = vpop.xlane.xlu0 %488
        %v490 = vsel %vm474, %v421, 0.0
        %491 = vadd.xlane.f32.xlu0 %v490
        %v492 = vpop.xlane.xlu0 %491
        %v493 = vsel %vm474, %v426, 0.0
        %494 = vadd.xlane.f32.xlu0 %v493
        %v495 = vpop.xlane.xlu0 %494
        %v496 = vsel %vm474, %v431, 0.0
        %497 = vadd.xlane.f32.xlu0 %v496
        %v498 = vpop.xlane.xlu0 %497
        %v499 = vsel %vm474, %v436, 0.0
        %500 = vadd.xlane.f32.xlu0 %v499
        %v501 = vpop.xlane.xlu0 %500
        %v502 = vsel %vm474, %v441, 0.0
        %503 = vadd.xlane.f32.xlu0 %v502
        %v504 = vpop.xlane.xlu0 %503
        %v505 = vsel %vm474, %v446, 0.0
        %506 = vadd.xlane.f32.xlu0 %v505
        %v507 = vpop.xlane.xlu0 %506
        %v508 = vsel %vm474, %v451, 0.0
        %509 = vadd.xlane.f32.xlu0 %v508
        %v510 = vpop.xlane.xlu0 %509
        %v511 = vsel %vm474, %v456, 0.0
        %512 = vadd.xlane.f32.xlu0 %v511
        %v513 = vpop.xlane.xlu0 %512
        %v514 = vsel %vm474, %v461, 0.0
        %515 = vadd.xlane.f32.xlu0 %v514
        %v516 = vpop.xlane.xlu0 %515
        %v517 = vsel %vm474, %v466, 0.0
        %518 = vadd.xlane.f32.xlu0 %v517
        %v519 = vpop.xlane.xlu0 %518
        %v520 = vsel %vm474, %v471, 0.0
        %521 = vadd.xlane.f32.xlu0 %v520
        %v522 = vpop.xlane.xlu0 %521
        %v523 = vrcp.pop 32.0
        %v524 = vmul.f32 %v477, %v523
        %v525 = vmul.f32 %v480, %v523
        %v526 = vmul.f32 %v483, %v523
        %v527 = vmul.f32 %v486, %v523
        %v528 = vmul.f32 %v489, %v523
        %v529 = vmul.f32 %v492, %v523
        %v530 = vmul.f32 %v495, %v523
        %v531 = vmul.f32 %v498, %v523
        %v532 = vmul.f32 %v501, %v523
        %v533 = vmul.f32 %v504, %v523
        %v534 = vmul.f32 %v507, %v523
        %v535 = vmul.f32 %v510, %v523
        %v536 = vmul.f32 %v513, %v523
        %v537 = vmul.f32 %v516, %v523
        %v538 = vmul.f32 %v519, %v523
        %v539 = vmul.f32 %v522, %v523
        %v540 = vsub.f32 %v396, %v524
        %v541 = vsub.f32 %v401, %v525
        %v542 = vsub.f32 %v406, %v526
        %v543 = vsub.f32 %v411, %v527
        %v544 = vsub.f32 %v416, %v528
        %v545 = vsub.f32 %v421, %v529
        %v546 = vsub.f32 %v426, %v530
        %v547 = vsub.f32 %v431, %v531
        %v548 = vsub.f32 %v436, %v532
        %v549 = vsub.f32 %v441, %v533
        %v550 = vsub.f32 %v446, %v534
        %v551 = vsub.f32 %v451, %v535
        %v552 = vsub.f32 %v456, %v536
        %v553 = vsub.f32 %v461, %v537
        %v554 = vsub.f32 %v466, %v538
        %v555 = vsub.f32 %v471, %v539
        %v556 = vmul.f32 %v540, %v540
        %v557 = vmul.f32 %v541, %v541
        %v558 = vmul.f32 %v542, %v542
        %v559 = vmul.f32 %v543, %v543
        %v560 = vmul.f32 %v544, %v544
        %v561 = vmul.f32 %v545, %v545
        %v562 = vmul.f32 %v546, %v546
        %v563 = vmul.f32 %v547, %v547
        %v564 = vmul.f32 %v548, %v548
        %v565 = vmul.f32 %v549, %v549
        %v566 = vmul.f32 %v550, %v550
        %v567 = vmul.f32 %v551, %v551
        %v568 = vmul.f32 %v552, %v552
        %v569 = vmul.f32 %v553, %v553
        %v570 = vmul.f32 %v554, %v554
        %v571 = vmul.f32 %v555, %v555
        %v572 = vsel %vm474, %v556, 0.0
        %573 = vadd.xlane.f32.xlu0 %v572
        %v574 = vpop.xlane.xlu0 %573
        %v575 = vsel %vm474, %v557, 0.0
        %576 = vadd.xlane.f32.xlu0 %v575
        %v577 = vpop.xlane.xlu0 %576
        %v578 = vsel %vm474, %v558, 0.0
        %579 = vadd.xlane.f32.xlu0 %v578
        %v580 = vpop.xlane.xlu0 %579
        %v581 = vsel %vm474, %v559, 0.0
        %582 = vadd.xlane.f32.xlu0 %v581
        %v583 = vpop.xlane.xlu0 %582
        %v584 = vsel %vm474, %v560, 0.0
        %585 = vadd.xlane.f32.xlu0 %v584
        %v586 = vpop.xlane.xlu0 %585
        %v587 = vsel %vm474, %v561, 0.0
        %588 = vadd.xlane.f32.xlu0 %v587
        %v589 = vpop.xlane.xlu0 %588
        %v590 = vsel %vm474, %v562, 0.0
        %591 = vadd.xlane.f32.xlu0 %v590
        %v592 = vpop.xlane.xlu0 %591
        %v593 = vsel %vm474, %v563, 0.0
        %594 = vadd.xlane.f32.xlu0 %v593
        %v595 = vpop.xlane.xlu0 %594
        %v596 = vsel %vm474, %v564, 0.0
        %597 = vadd.xlane.f32.xlu0 %v596
        %v598 = vpop.xlane.xlu0 %597
        %v599 = vsel %vm474, %v565, 0.0
        %600 = vadd.xlane.f32.xlu0 %v599
        %v601 = vpop.xlane.xlu0 %600
        %v602 = vsel %vm474, %v566, 0.0
        %603 = vadd.xlane.f32.xlu0 %v602
        %v604 = vpop.xlane.xlu0 %603
        %v605 = vsel %vm474, %v567, 0.0
        %606 = vadd.xlane.f32.xlu0 %v605
        %v607 = vpop.xlane.xlu0 %606
        %v608 = vsel %vm474, %v568, 0.0
        %609 = vadd.xlane.f32.xlu0 %v608
        %v610 = vpop.xlane.xlu0 %609
        %v611 = vsel %vm474, %v569, 0.0
        %612 = vadd.xlane.f32.xlu0 %v611
        %v613 = vpop.xlane.xlu0 %612
        %v614 = vsel %vm474, %v570, 0.0
        %615 = vadd.xlane.f32.xlu0 %v614
        %v616 = vpop.xlane.xlu0 %615
        %v617 = vsel %vm474, %v571, 0.0
        %618 = vadd.xlane.f32.xlu0 %v617
        %v619 = vpop.xlane.xlu0 %618
        %v620 = vmul.f32 %v574, %v523
        %v621 = vmul.f32 %v577, %v523
        %v622 = vmul.f32 %v580, %v523
        %v623 = vmul.f32 %v583, %v523
        %v624 = vmul.f32 %v586, %v523
        %v625 = vmul.f32 %v589, %v523
        %v626 = vmul.f32 %v592, %v523
        %v627 = vmul.f32 %v595, %v523
        %v628 = vmul.f32 %v598, %v523
        %v629 = vmul.f32 %v601, %v523
        %v630 = vmul.f32 %v604, %v523
        %v631 = vmul.f32 %v607, %v523
        %v632 = vmul.f32 %v610, %v523
        %v633 = vmul.f32 %v613, %v523
        %v634 = vmul.f32 %v616, %v523
        %v635 = vmul.f32 %v619, %v523
        %v636 = vadd.f32 %v620, 1e-05
        %v637 = vadd.f32 %v621, 1e-05
        %v638 = vadd.f32 %v622, 1e-05
        %v639 = vadd.f32 %v623, 1e-05
        %v640 = vadd.f32 %v624, 1e-05
        %v641 = vadd.f32 %v625, 1e-05
        %v642 = vadd.f32 %v626, 1e-05
        %v643 = vadd.f32 %v627, 1e-05
        %v644 = vadd.f32 %v628, 1e-05
        %v645 = vadd.f32 %v629, 1e-05
        %v646 = vadd.f32 %v630, 1e-05
        %v647 = vadd.f32 %v631, 1e-05
        %v648 = vadd.f32 %v632, 1e-05
        %v649 = vadd.f32 %v633, 1e-05
        %v650 = vadd.f32 %v634, 1e-05
        %v651 = vadd.f32 %v635, 1e-05
        %v652 = vrsqrt.pop %v636
        %v653 = vrsqrt.pop %v637
        %v654 = vrsqrt.pop %v638
        %v655 = vrsqrt.pop %v639
        %v656 = vrsqrt.pop %v640
        %v657 = vrsqrt.pop %v641
        %v658 = vrsqrt.pop %v642
        %v659 = vrsqrt.pop %v643
        %v660 = vrsqrt.pop %v644
        %v661 = vrsqrt.pop %v645
        %v662 = vrsqrt.pop %v646
        %v663 = vrsqrt.pop %v647
        %v664 = vrsqrt.pop %v648
        %v665 = vrsqrt.pop %v649
        %v666 = vrsqrt.pop %v650
        %v667 = vrsqrt.pop %v651
        %v668 = vlaneseq
        %v669 = vshrl.u32 %v668, 7
        %v670 = vsub.s32 1, %v669
        %v671 = vrot.slane %v273, %v670
        %v672 = vmul.f32 %v652, %v671
        %v673 = vmul.f32 %v653, %v671
        %v674 = vmul.f32 %v654, %v671
        %v675 = vmul.f32 %v655, %v671
        %v676 = vmul.f32 %v656, %v671
        %v677 = vmul.f32 %v657, %v671
        %v678 = vmul.f32 %v658, %v671
        %v679 = vmul.f32 %v659, %v671
        %v680 = vmul.f32 %v660, %v671
        %v681 = vmul.f32 %v661, %v671
        %v682 = vmul.f32 %v662, %v671
        %v683 = vmul.f32 %v663, %v671
        %v684 = vmul.f32 %v664, %v671
        %v685 = vmul.f32 %v665, %v671
        %v686 = vmul.f32 %v666, %v671
        %v687 = vmul.f32 %v667, %v671
        %v688 = vmul.f32 %v540, %v672
        %v689 = vmul.f32 %v541, %v673
        %v690 = vmul.f32 %v542, %v674
        %v691 = vmul.f32 %v543, %v675
        %v692 = vmul.f32 %v544, %v676
        %v693 = vmul.f32 %v545, %v677
        %v694 = vmul.f32 %v546, %v678
        %v695 = vmul.f32 %v547, %v679
        %v696 = vmul.f32 %v548, %v680
        %v697 = vmul.f32 %v549, %v681
        %v698 = vmul.f32 %v550, %v682
        %v699 = vmul.f32 %v551, %v683
        %v700 = vmul.f32 %v552, %v684
        %v701 = vmul.f32 %v553, %v685
        %v702 = vmul.f32 %v554, %v686
        %v703 = vmul.f32 %v555, %v687
        %v704 = vlaneseq
        %v705 = vshrl.u32 %v704, 7
        %v706 = vsub.s32 2, %v705
        %v707 = vrot.slane %v273, %v706
        %v708 = vadd.f32 %v688, %v707
        %v709 = vadd.f32 %v689, %v707
        %v710 = vadd.f32 %v690, %v707
        %v711 = vadd.f32 %v691, %v707
        %v712 = vadd.f32 %v692, %v707
        %v713 = vadd.f32 %v693, %v707
        %v714 = vadd.f32 %v694, %v707
        %v715 = vadd.f32 %v695, %v707
        %v716 = vadd.f32 %v696, %v707
        %v717 = vadd.f32 %v697, %v707
        %v718 = vadd.f32 %v698, %v707
        %v719 = vadd.f32 %v699, %v707
        %v720 = vadd.f32 %v700, %v707
        %v721 = vadd.f32 %v701, %v707
        %v722 = vadd.f32 %v702, %v707
        %v723 = vadd.f32 %v703, %v707
        %v724 = vmax.f32 %v708, 0.0
        %v725 = vmax.f32 %v709, 0.0
        %v726 = vmax.f32 %v710, 0.0
        %v727 = vmax.f32 %v711, 0.0
        %v728 = vmax.f32 %v712, 0.0
        %v729 = vmax.f32 %v713, 0.0
        %v730 = vmax.f32 %v714, 0.0
        %v731 = vmax.f32 %v715, 0.0
        %v732 = vmax.f32 %v716, 0.0
        %v733 = vmax.f32 %v717, 0.0
        %v734 = vmax.f32 %v718, 0.0
        %v735 = vmax.f32 %v719, 0.0
        %v736 = vmax.f32 %v720, 0.0
        %v737 = vmax.f32 %v721, 0.0
        %v738 = vmax.f32 %v722, 0.0
        %v739 = vmax.f32 %v723, 0.0
        %v740 = vlaneseq
        %v741 = vshrl.u32 %v740, 7
        %v742 = vsub.s32 0, %v741
        %v743 = vrot.slane %v274, %v742
        %v745 = vsel %vm474, %v724, 0
        %v748 = vsel %vm474, %v725, 0
        %v751 = vsel %vm474, %v726, 0
        %v754 = vsel %vm474, %v727, 0
        %v757 = vsel %vm474, %v728, 0
        %v760 = vsel %vm474, %v729, 0
        %v763 = vsel %vm474, %v730, 0
        %v766 = vsel %vm474, %v731, 0
        %v769 = vsel %vm474, %v732, 0
        %v772 = vsel %vm474, %v733, 0
        %v775 = vsel %vm474, %v734, 0
        %v778 = vsel %vm474, %v735, 0
        %v781 = vsel %vm474, %v736, 0
        %v784 = vsel %vm474, %v737, 0
        %v787 = vsel %vm474, %v738, 0
        %v790 = vsel %vm474, %v739, 0
        %792 = vmatprep.subr.mxu0 0.0
        %793 = vmatpush1.msra.mxu0 %v268
        %794 = vmatprep.subr.mxu0 0.0
        %795 = vmatpush1.msra.mxu0 %v269
        %796 = vmatprep.subr.mxu0 0.0
        %797 = vmatpush1.msra.mxu0 %v270
        %798 = vmatprep.subr.mxu0 0.0
        %799 = vmatpush1.msra.mxu0 %v271
        %800 = vmatprep.subr.mxu0 0.0
        %801 = vmatpush1.msra.mxu0 0.0
        %802 = vmatprep.subr.mxu0 0.0
        %803 = vmatpush1.msra.mxu0 0.0
        %804 = vmatprep.subr.mxu0 0.0
        %805 = vmatpush1.msra.mxu0 0.0
        %806 = vmatprep.subr.mxu0 0.0
        %807 = vmatpush1.msra.mxu0 0.0
        %808 = vmatprep.subr.mxu0 0.0
        %809 = vmatpush1.msra.mxu0 0.0
        %810 = vmatprep.subr.mxu0 0.0
        %811 = vmatpush1.msra.mxu0 0.0
        %812 = vmatprep.subr.mxu0 0.0
        %813 = vmatpush1.msra.mxu0 0.0
        %814 = vmatprep.subr.mxu0 0.0
        %815 = vmatpush1.msra.mxu0 0.0
        %816 = vmatprep.subr.mxu0 0.0
        %817 = vmatpush1.msra.mxu0 0.0
        %818 = vmatprep.subr.mxu0 0.0
        %819 = vmatpush1.msra.mxu0 0.0
        %820 = vmatprep.subr.mxu0 0.0
        %821 = vmatpush1.msra.mxu0 0.0
        %822 = vmatprep.subr.mxu0 0.0
        %823 = vmatpush1.msra.mxu0 0.0
        %824 = vmatprep.subr.mxu0 0.0
        %825 = vmatpush1.msra.mxu0 0.0
        %826 = vmatprep.subr.mxu0 0.0
        %827 = vmatpush1.msra.mxu0 0.0
        %828 = vmatprep.subr.mxu0 0.0
        %829 = vmatpush1.msra.mxu0 0.0
        %830 = vmatprep.subr.mxu0 0.0
        %831 = vmatpush1.msra.mxu0 0.0
        %832 = vmatprep.subr.mxu0 0.0
        %833 = vmatpush1.msra.mxu0 0.0
        %834 = vmatprep.subr.mxu0 0.0
        %835 = vmatpush1.msra.mxu0 0.0
        %836 = vmatprep.subr.mxu0 0.0
        %837 = vmatpush1.msra.mxu0 0.0
        %838 = vmatprep.subr.mxu0 0.0
        %839 = vmatpush1.msra.mxu0 0.0
        %840 = vmatprep.subr.mxu0 0.0
        %841 = vmatpush1.msra.mxu0 0.0
        %842 = vmatprep.subr.mxu0 0.0
        %843 = vmatpush1.msra.mxu0 0.0
        %844 = vmatprep.subr.mxu0 0.0
        %845 = vmatpush1.msra.mxu0 0.0
        %846 = vmatprep.subr.mxu0 0.0
        %847 = vmatpush1.msra.mxu0 0.0
        %848 = vmatprep.subr.mxu0 0.0
        %849 = vmatpush1.msra.mxu0 0.0
        %850 = vmatprep.subr.mxu0 0.0
        %851 = vmatpush1.msra.mxu0 0.0
        %852 = vmatprep.subr.mxu0 0.0
        %853 = vmatpush1.msra.mxu0 0.0
        %854 = vmatprep.subr.mxu0 0.0
        %855 = vmatpush1.msra.mxu0 0.0
        %856 = vmatprep.mubr.f32.mxu0 0.0
        %857 = vmatmul.mubr.f32.gmra.mrb[0].mxu0 %v745
        %v858 = vpop.f32.mrb[0].mxu0
        %v859 = vadd.f32 %v743, %v858
        %v860 = vpop.f32.mrb[0].mxu0
        %861 = vmatprep.mubr.f32.mxu0 0.0
        %862 = vmatmul.mubr.f32.gmra.mrb[0].mxu0 %v748
        %v863 = vpop.f32.mrb[0].mxu0
        %v864 = vadd.f32 %v743, %v863
        %v865 = vpop.f32.mrb[0].mxu0
        %866 = vmatprep.mubr.f32.mxu0 0.0
        %867 = vmatmul.mubr.f32.gmra.mrb[0].mxu0 %v751
        %v868 = vpop.f32.mrb[0].mxu0
        %v869 = vadd.f32 %v743, %v868
        %v870 = vpop.f32.mrb[0].mxu0
        %871 = vmatprep.mubr.f32.mxu0 0.0
        %872 = vmatmul.mubr.f32.gmra.mrb[0].mxu0 %v754
        %v873 = vpop.f32.mrb[0].mxu0
        %v874 = vadd.f32 %v743, %v873
        %v875 = vpop.f32.mrb[0].mxu0
        %876 = vmatprep.mubr.f32.mxu0 0.0
        %877 = vmatmul.mubr.f32.gmra.mrb[0].mxu0 %v757
        %v878 = vpop.f32.mrb[0].mxu0
        %v879 = vadd.f32 %v743, %v878
        %v880 = vpop.f32.mrb[0].mxu0
        %881 = vmatprep.mubr.f32.mxu0 0.0
        %882 = vmatmul.mubr.f32.gmra.mrb[0].mxu0 %v760
        %v883 = vpop.f32.mrb[0].mxu0
        %v884 = vadd.f32 %v743, %v883
        %v885 = vpop.f32.mrb[0].mxu0
        %886 = vmatprep.mubr.f32.mxu0 0.0
        %887 = vmatmul.mubr.f32.gmra.mrb[0].mxu0 %v763
        %v888 = vpop.f32.mrb[0].mxu0
        %v889 = vadd.f32 %v743, %v888
        %v890 = vpop.f32.mrb[0].mxu0
        %891 = vmatprep.mubr.f32.mxu0 0.0
        %892 = vmatmul.mubr.f32.gmra.mrb[0].mxu0 %v766
        %v893 = vpop.f32.mrb[0].mxu0
        %v894 = vadd.f32 %v743, %v893
        %v895 = vpop.f32.mrb[0].mxu0
        %896 = vmatprep.mubr.f32.mxu0 0.0
        %897 = vmatmul.mubr.f32.gmra.mrb[0].mxu0 %v769
        %v898 = vpop.f32.mrb[0].mxu0
        %v899 = vadd.f32 %v743, %v898
        %v900 = vpop.f32.mrb[0].mxu0
        %901 = vmatprep.mubr.f32.mxu0 0.0
        %902 = vmatmul.mubr.f32.gmra.mrb[0].mxu0 %v772
        %v903 = vpop.f32.mrb[0].mxu0
        %v904 = vadd.f32 %v743, %v903
        %v905 = vpop.f32.mrb[0].mxu0
        %906 = vmatprep.mubr.f32.mxu0 0.0
        %907 = vmatmul.mubr.f32.gmra.mrb[0].mxu0 %v775
        %v908 = vpop.f32.mrb[0].mxu0
        %v909 = vadd.f32 %v743, %v908
        %v910 = vpop.f32.mrb[0].mxu0
        %911 = vmatprep.mubr.f32.mxu0 0.0
        %912 = vmatmul.mubr.f32.gmra.mrb[0].mxu0 %v778
        %v913 = vpop.f32.mrb[0].mxu0
        %v914 = vadd.f32 %v743, %v913
        %v915 = vpop.f32.mrb[0].mxu0
        %916 = vmatprep.mubr.f32.mxu0 0.0
        %917 = vmatmul.mubr.f32.gmra.mrb[0].mxu0 %v781
        %v918 = vpop.f32.mrb[0].mxu0
        %v919 = vadd.f32 %v743, %v918
        %v920 = vpop.f32.mrb[0].mxu0
        %921 = vmatprep.mubr.f32.mxu0 0.0
        %922 = vmatmul.mubr.f32.gmra.mrb[0].mxu0 %v784
        %v923 = vpop.f32.mrb[0].mxu0
        %v924 = vadd.f32 %v743, %v923
        %v925 = vpop.f32.mrb[0].mxu0
        %926 = vmatprep.mubr.f32.mxu0 0.0
        %927 = vmatmul.mubr.f32.gmra.mrb[0].mxu0 %v787
        %v928 = vpop.f32.mrb[0].mxu0
        %v929 = vadd.f32 %v743, %v928
        %v930 = vpop.f32.mrb[0].mxu0
        %931 = vmatprep.mubr.f32.mxu0 0.0
        %932 = vmatmul.mubr.f32.gmra.mrb[0].mxu0 %v790
        %v933 = vpop.f32.mrb[0].mxu0
        %v934 = vadd.f32 %v743, %v933
        %v935 = vpop.f32.mrb[0].mxu0
        %936 = vdwg.mxu0
        %v937 = vsel %vm474, %v859, 0.0
        %938 = vadd.xlane.f32.xlu0 %v937
        %v939 = vpop.xlane.xlu0 %938
        %v940 = vsel %vm474, %v864, 0.0
        %941 = vadd.xlane.f32.xlu0 %v940
        %v942 = vpop.xlane.xlu0 %941
        %v943 = vsel %vm474, %v869, 0.0
        %944 = vadd.xlane.f32.xlu0 %v943
        %v945 = vpop.xlane.xlu0 %944
        %v946 = vsel %vm474, %v874, 0.0
        %947 = vadd.xlane.f32.xlu0 %v946
        %v948 = vpop.xlane.xlu0 %947
        %v949 = vsel %vm474, %v879, 0.0
        %950 = vadd.xlane.f32.xlu0 %v949
        %v951 = vpop.xlane.xlu0 %950
        %v952 = vsel %vm474, %v884, 0.0
        %953 = vadd.xlane.f32.xlu0 %v952
        %v954 = vpop.xlane.xlu0 %953
        %v955 = vsel %vm474, %v889, 0.0
        %956 = vadd.xlane.f32.xlu0 %v955
        %v957 = vpop.xlane.xlu0 %956
        %v958 = vsel %vm474, %v894, 0.0
        %959 = vadd.xlane.f32.xlu0 %v958
        %v960 = vpop.xlane.xlu0 %959
        %v961 = vsel %vm474, %v899, 0.0
        %962 = vadd.xlane.f32.xlu0 %v961
        %v963 = vpop.xlane.xlu0 %962
        %v964 = vsel %vm474, %v904, 0.0
        %965 = vadd.xlane.f32.xlu0 %v964
        %v966 = vpop.xlane.xlu0 %965
        %v967 = vsel %vm474, %v909, 0.0
        %968 = vadd.xlane.f32.xlu0 %v967
        %v969 = vpop.xlane.xlu0 %968
        %v970 = vsel %vm474, %v914, 0.0
        %971 = vadd.xlane.f32.xlu0 %v970
        %v972 = vpop.xlane.xlu0 %971
        %v973 = vsel %vm474, %v919, 0.0
        %974 = vadd.xlane.f32.xlu0 %v973
        %v975 = vpop.xlane.xlu0 %974
        %v976 = vsel %vm474, %v924, 0.0
        %977 = vadd.xlane.f32.xlu0 %v976
        %v978 = vpop.xlane.xlu0 %977
        %v979 = vsel %vm474, %v929, 0.0
        %980 = vadd.xlane.f32.xlu0 %v979
        %v981 = vpop.xlane.xlu0 %980
        %v982 = vsel %vm474, %v934, 0.0
        %983 = vadd.xlane.f32.xlu0 %v982
        %v984 = vpop.xlane.xlu0 %983
        %v985 = vmul.f32 %v939, %v523
        %v986 = vmul.f32 %v942, %v523
        %v987 = vmul.f32 %v945, %v523
        %v988 = vmul.f32 %v948, %v523
        %v989 = vmul.f32 %v951, %v523
        %v990 = vmul.f32 %v954, %v523
        %v991 = vmul.f32 %v957, %v523
        %v992 = vmul.f32 %v960, %v523
        %v993 = vmul.f32 %v963, %v523
        %v994 = vmul.f32 %v966, %v523
        %v995 = vmul.f32 %v969, %v523
        %v996 = vmul.f32 %v972, %v523
        %v997 = vmul.f32 %v975, %v523
        %v998 = vmul.f32 %v978, %v523
        %v999 = vmul.f32 %v981, %v523
        %v1000 = vmul.f32 %v984, %v523
        %v1001 = vsub.f32 %v859, %v985
        %v1002 = vsub.f32 %v864, %v986
        %v1003 = vsub.f32 %v869, %v987
        %v1004 = vsub.f32 %v874, %v988
        %v1005 = vsub.f32 %v879, %v989
        %v1006 = vsub.f32 %v884, %v990
        %v1007 = vsub.f32 %v889, %v991
        %v1008 = vsub.f32 %v894, %v992
        %v1009 = vsub.f32 %v899, %v993
        %v1010 = vsub.f32 %v904, %v994
        %v1011 = vsub.f32 %v909, %v995
        %v1012 = vsub.f32 %v914, %v996
        %v1013 = vsub.f32 %v919, %v997
        %v1014 = vsub.f32 %v924, %v998
        %v1015 = vsub.f32 %v929, %v999
        %v1016 = vsub.f32 %v934, %v1000
        %v1017 = vmul.f32 %v1001, %v1001
        %v1018 = vmul.f32 %v1002, %v1002
        %v1019 = vmul.f32 %v1003, %v1003
        %v1020 = vmul.f32 %v1004, %v1004
        %v1021 = vmul.f32 %v1005, %v1005
        %v1022 = vmul.f32 %v1006, %v1006
        %v1023 = vmul.f32 %v1007, %v1007
        %v1024 = vmul.f32 %v1008, %v1008
        %v1025 = vmul.f32 %v1009, %v1009
        %v1026 = vmul.f32 %v1010, %v1010
        %v1027 = vmul.f32 %v1011, %v1011
        %v1028 = vmul.f32 %v1012, %v1012
        %v1029 = vmul.f32 %v1013, %v1013
        %v1030 = vmul.f32 %v1014, %v1014
        %v1031 = vmul.f32 %v1015, %v1015
        %v1032 = vmul.f32 %v1016, %v1016
        %v1033 = vsel %vm474, %v1017, 0.0
        %1034 = vadd.xlane.f32.xlu0 %v1033
        %v1035 = vpop.xlane.xlu0 %1034
        %v1036 = vsel %vm474, %v1018, 0.0
        %1037 = vadd.xlane.f32.xlu0 %v1036
        %v1038 = vpop.xlane.xlu0 %1037
        %v1039 = vsel %vm474, %v1019, 0.0
        %1040 = vadd.xlane.f32.xlu0 %v1039
        %v1041 = vpop.xlane.xlu0 %1040
        %v1042 = vsel %vm474, %v1020, 0.0
        %1043 = vadd.xlane.f32.xlu0 %v1042
        %v1044 = vpop.xlane.xlu0 %1043
        %v1045 = vsel %vm474, %v1021, 0.0
        %1046 = vadd.xlane.f32.xlu0 %v1045
        %v1047 = vpop.xlane.xlu0 %1046
        %v1048 = vsel %vm474, %v1022, 0.0
        %1049 = vadd.xlane.f32.xlu0 %v1048
        %v1050 = vpop.xlane.xlu0 %1049
        %v1051 = vsel %vm474, %v1023, 0.0
        %1052 = vadd.xlane.f32.xlu0 %v1051
        %v1053 = vpop.xlane.xlu0 %1052
        %v1054 = vsel %vm474, %v1024, 0.0
        %1055 = vadd.xlane.f32.xlu0 %v1054
        %v1056 = vpop.xlane.xlu0 %1055
        %v1057 = vsel %vm474, %v1025, 0.0
        %1058 = vadd.xlane.f32.xlu0 %v1057
        %v1059 = vpop.xlane.xlu0 %1058
        %v1060 = vsel %vm474, %v1026, 0.0
        %1061 = vadd.xlane.f32.xlu0 %v1060
        %v1062 = vpop.xlane.xlu0 %1061
        %v1063 = vsel %vm474, %v1027, 0.0
        %1064 = vadd.xlane.f32.xlu0 %v1063
        %v1065 = vpop.xlane.xlu0 %1064
        %v1066 = vsel %vm474, %v1028, 0.0
        %1067 = vadd.xlane.f32.xlu0 %v1066
        %v1068 = vpop.xlane.xlu0 %1067
        %v1069 = vsel %vm474, %v1029, 0.0
        %1070 = vadd.xlane.f32.xlu0 %v1069
        %v1071 = vpop.xlane.xlu0 %1070
        %v1072 = vsel %vm474, %v1030, 0.0
        %1073 = vadd.xlane.f32.xlu0 %v1072
        %v1074 = vpop.xlane.xlu0 %1073
        %v1075 = vsel %vm474, %v1031, 0.0
        %1076 = vadd.xlane.f32.xlu0 %v1075
        %v1077 = vpop.xlane.xlu0 %1076
        %v1078 = vsel %vm474, %v1032, 0.0
        %1079 = vadd.xlane.f32.xlu0 %v1078
        %v1080 = vpop.xlane.xlu0 %1079
        %v1081 = vmul.f32 %v1035, %v523
        %v1082 = vmul.f32 %v1038, %v523
        %v1083 = vmul.f32 %v1041, %v523
        %v1084 = vmul.f32 %v1044, %v523
        %v1085 = vmul.f32 %v1047, %v523
        %v1086 = vmul.f32 %v1050, %v523
        %v1087 = vmul.f32 %v1053, %v523
        %v1088 = vmul.f32 %v1056, %v523
        %v1089 = vmul.f32 %v1059, %v523
        %v1090 = vmul.f32 %v1062, %v523
        %v1091 = vmul.f32 %v1065, %v523
        %v1092 = vmul.f32 %v1068, %v523
        %v1093 = vmul.f32 %v1071, %v523
        %v1094 = vmul.f32 %v1074, %v523
        %v1095 = vmul.f32 %v1077, %v523
        %v1096 = vmul.f32 %v1080, %v523
        %v1097 = vadd.f32 %v1081, 1e-05
        %v1098 = vadd.f32 %v1082, 1e-05
        %v1099 = vadd.f32 %v1083, 1e-05
        %v1100 = vadd.f32 %v1084, 1e-05
        %v1101 = vadd.f32 %v1085, 1e-05
        %v1102 = vadd.f32 %v1086, 1e-05
        %v1103 = vadd.f32 %v1087, 1e-05
        %v1104 = vadd.f32 %v1088, 1e-05
        %v1105 = vadd.f32 %v1089, 1e-05
        %v1106 = vadd.f32 %v1090, 1e-05
        %v1107 = vadd.f32 %v1091, 1e-05
        %v1108 = vadd.f32 %v1092, 1e-05
        %v1109 = vadd.f32 %v1093, 1e-05
        %v1110 = vadd.f32 %v1094, 1e-05
        %v1111 = vadd.f32 %v1095, 1e-05
        %v1112 = vadd.f32 %v1096, 1e-05
        %v1113 = vrsqrt.pop %v1097
        %v1114 = vrsqrt.pop %v1098
        %v1115 = vrsqrt.pop %v1099
        %v1116 = vrsqrt.pop %v1100
        %v1117 = vrsqrt.pop %v1101
        %v1118 = vrsqrt.pop %v1102
        %v1119 = vrsqrt.pop %v1103
        %v1120 = vrsqrt.pop %v1104
        %v1121 = vrsqrt.pop %v1105
        %v1122 = vrsqrt.pop %v1106
        %v1123 = vrsqrt.pop %v1107
        %v1124 = vrsqrt.pop %v1108
        %v1125 = vrsqrt.pop %v1109
        %v1126 = vrsqrt.pop %v1110
        %v1127 = vrsqrt.pop %v1111
        %v1128 = vrsqrt.pop %v1112
        %v1129 = vlaneseq
        %v1130 = vshrl.u32 %v1129, 7
        %v1131 = vsub.s32 1, %v1130
        %v1132 = vrot.slane %v274, %v1131
        %v1133 = vmul.f32 %v1113, %v1132
        %v1134 = vmul.f32 %v1114, %v1132
        %v1135 = vmul.f32 %v1115, %v1132
        %v1136 = vmul.f32 %v1116, %v1132
        %v1137 = vmul.f32 %v1117, %v1132
        %v1138 = vmul.f32 %v1118, %v1132
        %v1139 = vmul.f32 %v1119, %v1132
        %v1140 = vmul.f32 %v1120, %v1132
        %v1141 = vmul.f32 %v1121, %v1132
        %v1142 = vmul.f32 %v1122, %v1132
        %v1143 = vmul.f32 %v1123, %v1132
        %v1144 = vmul.f32 %v1124, %v1132
        %v1145 = vmul.f32 %v1125, %v1132
        %v1146 = vmul.f32 %v1126, %v1132
        %v1147 = vmul.f32 %v1127, %v1132
        %v1148 = vmul.f32 %v1128, %v1132
        %v1149 = vmul.f32 %v1001, %v1133
        %v1150 = vmul.f32 %v1002, %v1134
        %v1151 = vmul.f32 %v1003, %v1135
        %v1152 = vmul.f32 %v1004, %v1136
        %v1153 = vmul.f32 %v1005, %v1137
        %v1154 = vmul.f32 %v1006, %v1138
        %v1155 = vmul.f32 %v1007, %v1139
        %v1156 = vmul.f32 %v1008, %v1140
        %v1157 = vmul.f32 %v1009, %v1141
        %v1158 = vmul.f32 %v1010, %v1142
        %v1159 = vmul.f32 %v1011, %v1143
        %v1160 = vmul.f32 %v1012, %v1144
        %v1161 = vmul.f32 %v1013, %v1145
        %v1162 = vmul.f32 %v1014, %v1146
        %v1163 = vmul.f32 %v1015, %v1147
        %v1164 = vmul.f32 %v1016, %v1148
        %v1165 = vlaneseq
        %v1166 = vshrl.u32 %v1165, 7
        %v1167 = vsub.s32 2, %v1166
        %v1168 = vrot.slane %v274, %v1167
        %v1169 = vadd.f32 %v1149, %v1168
        %v1170 = vadd.f32 %v1150, %v1168
        %v1171 = vadd.f32 %v1151, %v1168
        %v1172 = vadd.f32 %v1152, %v1168
        %v1173 = vadd.f32 %v1153, %v1168
        %v1174 = vadd.f32 %v1154, %v1168
        %v1175 = vadd.f32 %v1155, %v1168
        %v1176 = vadd.f32 %v1156, %v1168
        %v1177 = vadd.f32 %v1157, %v1168
        %v1178 = vadd.f32 %v1158, %v1168
        %v1179 = vadd.f32 %v1159, %v1168
        %v1180 = vadd.f32 %v1160, %v1168
        %v1181 = vadd.f32 %v1161, %v1168
        %v1182 = vadd.f32 %v1162, %v1168
        %v1183 = vadd.f32 %v1163, %v1168
        %v1184 = vadd.f32 %v1164, %v1168
        %v1185 = vlaneseq
        %v1186 = vshrl.u32 %v1185, 7
        %v1187 = vsub.s32 3, %v1186
        %v1188 = vrot.slane %v274, %v1187
        %1189 = vrot.lane.b32.xlu0 %v252, 120
        %v1190 = vpop.permute.xlu0 %1189
        %1191 = vrot.lane.b32.xlu0 %v253, 120
        %v1192 = vpop.permute.xlu0 %1191
        %1193 = vrot.lane.b32.xlu0 %v254, 120
        %v1194 = vpop.permute.xlu0 %1193
        %1195 = vrot.lane.b32.xlu0 %v255, 120
        %v1196 = vpop.permute.xlu0 %1195
        %1197 = vrot.lane.b32.xlu0 %v256, 120
        %v1198 = vpop.permute.xlu0 %1197
        %1199 = vrot.lane.b32.xlu0 %v257, 120
        %v1200 = vpop.permute.xlu0 %1199
        %1201 = vrot.lane.b32.xlu0 %v258, 120
        %v1202 = vpop.permute.xlu0 %1201
        %1203 = vrot.lane.b32.xlu0 %v259, 120
        %v1204 = vpop.permute.xlu0 %1203
        %1205 = vrot.lane.b32.xlu0 %v260, 120
        %v1206 = vpop.permute.xlu0 %1205
        %1207 = vrot.lane.b32.xlu0 %v261, 120
        %v1208 = vpop.permute.xlu0 %1207
        %1209 = vrot.lane.b32.xlu0 %v262, 120
        %v1210 = vpop.permute.xlu0 %1209
        %1211 = vrot.lane.b32.xlu0 %v263, 120
        %v1212 = vpop.permute.xlu0 %1211
        %1213 = vrot.lane.b32.xlu0 %v264, 120
        %v1214 = vpop.permute.xlu0 %1213
        %1215 = vrot.lane.b32.xlu0 %v265, 120
        %v1216 = vpop.permute.xlu0 %1215
        %1217 = vrot.lane.b32.xlu0 %v266, 120
        %v1218 = vpop.permute.xlu0 %1217
        %1219 = vrot.lane.b32.xlu0 %v267, 120
        %v1220 = vpop.permute.xlu0 %1219
        %vm1221 = vcmask 31744
        %v1222 = vsel %vm1221, %v1190, 0
        %v1224 = vsel %vm1221, %v1192, 0
        %v1226 = vsel %vm1221, %v1194, 0
        %v1228 = vsel %vm1221, %v1196, 0
        %v1230 = vsel %vm1221, %v1198, 0
        %v1232 = vsel %vm1221, %v1200, 0
        %v1234 = vsel %vm1221, %v1202, 0
        %v1236 = vsel %vm1221, %v1204, 0
        %v1238 = vsel %vm1221, %v1206, 0
        %v1240 = vsel %vm1221, %v1208, 0
        %v1242 = vsel %vm1221, %v1210, 0
        %v1244 = vsel %vm1221, %v1212, 0
        %v1246 = vsel %vm1221, %v1214, 0
        %v1248 = vsel %vm1221, %v1216, 0
        %v1250 = vsel %vm1221, %v1218, 0
        %v1252 = vsel %vm1221, %v1220, 0
        %vm1254 = vcmask 1043456
        %v1256 = vsel %vm1254, %v272, 0
        %1258 = vmatprep.subr.mxu0 0.0
        %1259 = vmatpush1.msra.mxu0 %v1256
        %1260 = vmatprep.subr.mxu0 0.0
        %1261 = vmatpush1.msra.mxu0 0.0
        %1262 = vmatprep.subr.mxu0 0.0
        %1263 = vmatpush1.msra.mxu0 0.0
        %1264 = vmatprep.subr.mxu0 0.0
        %1265 = vmatpush1.msra.mxu0 0.0
        %1266 = vmatprep.subr.mxu0 0.0
        %1267 = vmatpush1.msra.mxu0 0.0
        %1268 = vmatprep.subr.mxu0 0.0
        %1269 = vmatpush1.msra.mxu0 0.0
        %1270 = vmatprep.subr.mxu0 0.0
        %1271 = vmatpush1.msra.mxu0 0.0
        %1272 = vmatprep.subr.mxu0 0.0
        %1273 = vmatpush1.msra.mxu0 0.0
        %1274 = vmatprep.subr.mxu0 0.0
        %1275 = vmatpush1.msra.mxu0 0.0
        %1276 = vmatprep.subr.mxu0 0.0
        %1277 = vmatpush1.msra.mxu0 0.0
        %1278 = vmatprep.subr.mxu0 0.0
        %1279 = vmatpush1.msra.mxu0 0.0
        %1280 = vmatprep.subr.mxu0 0.0
        %1281 = vmatpush1.msra.mxu0 0.0
        %1282 = vmatprep.subr.mxu0 0.0
        %1283 = vmatpush1.msra.mxu0 0.0
        %1284 = vmatprep.subr.mxu0 0.0
        %1285 = vmatpush1.msra.mxu0 0.0
        %1286 = vmatprep.subr.mxu0 0.0
        %1287 = vmatpush1.msra.mxu0 0.0
        %1288 = vmatprep.subr.mxu0 0.0
        %1289 = vmatpush1.msra.mxu0 0.0
        %1290 = vmatprep.subr.mxu0 0.0
        %1291 = vmatpush1.msra.mxu0 0.0
        %1292 = vmatprep.subr.mxu0 0.0
        %1293 = vmatpush1.msra.mxu0 0.0
        %1294 = vmatprep.subr.mxu0 0.0
        %1295 = vmatpush1.msra.mxu0 0.0
        %1296 = vmatprep.subr.mxu0 0.0
        %1297 = vmatpush1.msra.mxu0 0.0
        %1298 = vmatprep.subr.mxu0 0.0
        %1299 = vmatpush1.msra.mxu0 0.0
        %1300 = vmatprep.subr.mxu0 0.0
        %1301 = vmatpush1.msra.mxu0 0.0
        %1302 = vmatprep.subr.mxu0 0.0
        %1303 = vmatpush1.msra.mxu0 0.0
        %1304 = vmatprep.subr.mxu0 0.0
        %1305 = vmatpush1.msra.mxu0 0.0
        %1306 = vmatprep.subr.mxu0 0.0
        %1307 = vmatpush1.msra.mxu0 0.0
        %1308 = vmatprep.subr.mxu0 0.0
        %1309 = vmatpush1.msra.mxu0 0.0
        %1310 = vmatprep.subr.mxu0 0.0
        %1311 = vmatpush1.msra.mxu0 0.0
        %1312 = vmatprep.subr.mxu0 0.0
        %1313 = vmatpush1.msra.mxu0 0.0
        %1314 = vmatprep.subr.mxu0 0.0
        %1315 = vmatpush1.msra.mxu0 0.0
        %1316 = vmatprep.subr.mxu0 0.0
        %1317 = vmatpush1.msra.mxu0 0.0
        %1318 = vmatprep.subr.mxu0 0.0
        %1319 = vmatpush1.msra.mxu0 0.0
        %1320 = vmatprep.subr.mxu0 0.0
        %1321 = vmatpush1.msra.mxu0 0.0
        %1322 = vmatprep.mubr.f32.mxu0 0.0
        %1323 = vmatmul.mubr.f32.gmra.mrb[0].mxu0 %v1222
        %v1324 = vpop.f32.mrb[0].mxu0
        %v1325 = vadd.f32 %v1188, %v1324
        %v1326 = vpop.f32.mrb[0].mxu0
        %1327 = vmatprep.mubr.f32.mxu0 0.0
        %1328 = vmatmul.mubr.f32.gmra.mrb[0].mxu0 %v1224
        %v1329 = vpop.f32.mrb[0].mxu0
        %v1330 = vadd.f32 %v1188, %v1329
        %v1331 = vpop.f32.mrb[0].mxu0
        %1332 = vmatprep.mubr.f32.mxu0 0.0
        %1333 = vmatmul.mubr.f32.gmra.mrb[0].mxu0 %v1226
        %v1334 = vpop.f32.mrb[0].mxu0
        %v1335 = vadd.f32 %v1188, %v1334
        %v1336 = vpop.f32.mrb[0].mxu0
        %1337 = vmatprep.mubr.f32.mxu0 0.0
        %1338 = vmatmul.mubr.f32.gmra.mrb[0].mxu0 %v1228
        %v1339 = vpop.f32.mrb[0].mxu0
        %v1340 = vadd.f32 %v1188, %v1339
        %v1341 = vpop.f32.mrb[0].mxu0
        %1342 = vmatprep.mubr.f32.mxu0 0.0
        %1343 = vmatmul.mubr.f32.gmra.mrb[0].mxu0 %v1230
        %v1344 = vpop.f32.mrb[0].mxu0
        %v1345 = vadd.f32 %v1188, %v1344
        %v1346 = vpop.f32.mrb[0].mxu0
        %1347 = vmatprep.mubr.f32.mxu0 0.0
        %1348 = vmatmul.mubr.f32.gmra.mrb[0].mxu0 %v1232
        %v1349 = vpop.f32.mrb[0].mxu0
        %v1350 = vadd.f32 %v1188, %v1349
        %v1351 = vpop.f32.mrb[0].mxu0
        %1352 = vmatprep.mubr.f32.mxu0 0.0
        %1353 = vmatmul.mubr.f32.gmra.mrb[0].mxu0 %v1234
        %v1354 = vpop.f32.mrb[0].mxu0
        %v1355 = vadd.f32 %v1188, %v1354
        %v1356 = vpop.f32.mrb[0].mxu0
        %1357 = vmatprep.mubr.f32.mxu0 0.0
        %1358 = vmatmul.mubr.f32.gmra.mrb[0].mxu0 %v1236
        %v1359 = vpop.f32.mrb[0].mxu0
        %v1360 = vadd.f32 %v1188, %v1359
        %v1361 = vpop.f32.mrb[0].mxu0
        %1362 = vmatprep.mubr.f32.mxu0 0.0
        %1363 = vmatmul.mubr.f32.gmra.mrb[0].mxu0 %v1238
        %v1364 = vpop.f32.mrb[0].mxu0
        %v1365 = vadd.f32 %v1188, %v1364
        %v1366 = vpop.f32.mrb[0].mxu0
        %1367 = vmatprep.mubr.f32.mxu0 0.0
        %1368 = vmatmul.mubr.f32.gmra.mrb[0].mxu0 %v1240
        %v1369 = vpop.f32.mrb[0].mxu0
        %v1370 = vadd.f32 %v1188, %v1369
        %v1371 = vpop.f32.mrb[0].mxu0
        %1372 = vmatprep.mubr.f32.mxu0 0.0
        %1373 = vmatmul.mubr.f32.gmra.mrb[0].mxu0 %v1242
        %v1374 = vpop.f32.mrb[0].mxu0
        %v1375 = vadd.f32 %v1188, %v1374
        %v1376 = vpop.f32.mrb[0].mxu0
        %1377 = vmatprep.mubr.f32.mxu0 0.0
        %1378 = vmatmul.mubr.f32.gmra.mrb[0].mxu0 %v1244
        %v1379 = vpop.f32.mrb[0].mxu0
        %v1380 = vadd.f32 %v1188, %v1379
        %v1381 = vpop.f32.mrb[0].mxu0
        %1382 = vmatprep.mubr.f32.mxu0 0.0
        %1383 = vmatmul.mubr.f32.gmra.mrb[0].mxu0 %v1246
        %v1384 = vpop.f32.mrb[0].mxu0
        %v1385 = vadd.f32 %v1188, %v1384
        %v1386 = vpop.f32.mrb[0].mxu0
        %1387 = vmatprep.mubr.f32.mxu0 0.0
        %1388 = vmatmul.mubr.f32.gmra.mrb[0].mxu0 %v1248
        %v1389 = vpop.f32.mrb[0].mxu0
        %v1390 = vadd.f32 %v1188, %v1389
        %v1391 = vpop.f32.mrb[0].mxu0
        %1392 = vmatprep.mubr.f32.mxu0 0.0
        %1393 = vmatmul.mubr.f32.gmra.mrb[0].mxu0 %v1250
        %v1394 = vpop.f32.mrb[0].mxu0
        %v1395 = vadd.f32 %v1188, %v1394
        %v1396 = vpop.f32.mrb[0].mxu0
        %1397 = vmatprep.mubr.f32.mxu0 0.0
        %1398 = vmatmul.mubr.f32.gmra.mrb[0].mxu0 %v1252
        %v1399 = vpop.f32.mrb[0].mxu0
        %v1400 = vadd.f32 %v1188, %v1399
        %v1401 = vpop.f32.mrb[0].mxu0
        %1402 = vdwg.mxu0
        %v1403 = vmax.f32 %v1325, 0.0
        %v1404 = vmax.f32 %v1330, 0.0
        %v1405 = vmax.f32 %v1335, 0.0
        %v1406 = vmax.f32 %v1340, 0.0
        %v1407 = vmax.f32 %v1345, 0.0
        %v1408 = vmax.f32 %v1350, 0.0
        %v1409 = vmax.f32 %v1355, 0.0
        %v1410 = vmax.f32 %v1360, 0.0
        %v1411 = vmax.f32 %v1365, 0.0
        %v1412 = vmax.f32 %v1370, 0.0
        %v1413 = vmax.f32 %v1375, 0.0
        %v1414 = vmax.f32 %v1380, 0.0
        %v1415 = vmax.f32 %v1385, 0.0
        %v1416 = vmax.f32 %v1390, 0.0
        %v1417 = vmax.f32 %v1395, 0.0
        %v1418 = vmax.f32 %v1400, 0.0
        %v1419 = vadd.f32 %v1169, %v1403
        %v1420 = vadd.f32 %v1170, %v1404
        %v1421 = vadd.f32 %v1171, %v1405
        %v1422 = vadd.f32 %v1172, %v1406
        %v1423 = vadd.f32 %v1173, %v1407
        %v1424 = vadd.f32 %v1174, %v1408
        %v1425 = vadd.f32 %v1175, %v1409
        %v1426 = vadd.f32 %v1176, %v1410
        %v1427 = vadd.f32 %v1177, %v1411
        %v1428 = vadd.f32 %v1178, %v1412
        %v1429 = vadd.f32 %v1179, %v1413
        %v1430 = vadd.f32 %v1180, %v1414
        %v1431 = vadd.f32 %v1181, %v1415
        %v1432 = vadd.f32 %v1182, %v1416
        %v1433 = vadd.f32 %v1183, %v1417
        %v1434 = vadd.f32 %v1184, %v1418
        %v1435 = vmax.f32 %v1419, 0.0
        %v1436 = vmax.f32 %v1420, 0.0
        %v1437 = vmax.f32 %v1421, 0.0
        %v1438 = vmax.f32 %v1422, 0.0
        %v1439 = vmax.f32 %v1423, 0.0
        %v1440 = vmax.f32 %v1424, 0.0
        %v1441 = vmax.f32 %v1425, 0.0
        %v1442 = vmax.f32 %v1426, 0.0
        %v1443 = vmax.f32 %v1427, 0.0
        %v1444 = vmax.f32 %v1428, 0.0
        %v1445 = vmax.f32 %v1429, 0.0
        %v1446 = vmax.f32 %v1430, 0.0
        %v1447 = vmax.f32 %v1431, 0.0
        %v1448 = vmax.f32 %v1432, 0.0
        %v1449 = vmax.f32 %v1433, 0.0
        %v1450 = vmax.f32 %v1434, 0.0
        %s1451 = sld [smem:[#allocation2]]
        %v1452 = vstv %s1451
        %v1454 = vrot.slane %v274, 4
        %v1455 = vsel %vm474, %v1454, 0
        %v1458 = vsel %vm474, %v1435, 0
        %v1461 = vsel %vm474, %v1436, 0
        %v1464 = vsel %vm474, %v1437, 0
        %v1467 = vsel %vm474, %v1438, 0
        %v1470 = vsel %vm474, %v1439, 0
        %v1473 = vsel %vm474, %v1440, 0
        %v1476 = vsel %vm474, %v1441, 0
        %v1479 = vsel %vm474, %v1442, 0
        %v1482 = vsel %vm474, %v1443, 0
        %v1485 = vsel %vm474, %v1444, 0
        %v1488 = vsel %vm474, %v1445, 0
        %v1491 = vsel %vm474, %v1446, 0
        %v1494 = vsel %vm474, %v1447, 0
        %v1497 = vsel %vm474, %v1448, 0
        %v1500 = vsel %vm474, %v1449, 0
        %v1503 = vsel %vm474, %v1450, 0
        %1505 = vmatprep.subr.mxu0 0.0
        %1506 = vmatpush1.xpose.msra.mxu0 %v1458
        %1507 = vmatprep.subr.mxu0 0.0
        %1508 = vmatpush1.xpose.msra.mxu0 %v1461
        %1509 = vmatprep.subr.mxu0 0.0
        %1510 = vmatpush1.xpose.msra.mxu0 %v1464
        %1511 = vmatprep.subr.mxu0 0.0
        %1512 = vmatpush1.xpose.msra.mxu0 %v1467
        %1513 = vmatprep.subr.mxu0 0.0
        %1514 = vmatpush1.xpose.msra.mxu0 %v1470
        %1515 = vmatprep.subr.mxu0 0.0
        %1516 = vmatpush1.xpose.msra.mxu0 %v1473
        %1517 = vmatprep.subr.mxu0 0.0
        %1518 = vmatpush1.xpose.msra.mxu0 %v1476
        %1519 = vmatprep.subr.mxu0 0.0
        %1520 = vmatpush1.xpose.msra.mxu0 %v1479
        %1521 = vmatprep.subr.mxu0 0.0
        %1522 = vmatpush1.xpose.msra.mxu0 %v1482
        %1523 = vmatprep.subr.mxu0 0.0
        %1524 = vmatpush1.xpose.msra.mxu0 %v1485
        %1525 = vmatprep.subr.mxu0 0.0
        %1526 = vmatpush1.xpose.msra.mxu0 %v1488
        %1527 = vmatprep.subr.mxu0 0.0
        %1528 = vmatpush1.xpose.msra.mxu0 %v1491
        %1529 = vmatprep.subr.mxu0 0.0
        %1530 = vmatpush1.xpose.msra.mxu0 %v1494
        %1531 = vmatprep.subr.mxu0 0.0
        %1532 = vmatpush1.xpose.msra.mxu0 %v1497
        %1533 = vmatprep.subr.mxu0 0.0
        %1534 = vmatpush1.xpose.msra.mxu0 %v1500
        %1535 = vmatprep.subr.mxu0 0.0
        %1536 = vmatpush1.xpose.msra.mxu0 %v1503
        %1537 = vmatprep.subr.mxu0 0.0
        %1538 = vmatpush1.xpose.msra.mxu0 0.0
        %1539 = vmatprep.subr.mxu0 0.0
        %1540 = vmatpush1.xpose.msra.mxu0 0.0
        %1541 = vmatprep.subr.mxu0 0.0
        %1542 = vmatpush1.xpose.msra.mxu0 0.0
        %1543 = vmatprep.subr.mxu0 0.0
        %1544 = vmatpush1.xpose.msra.mxu0 0.0
        %1545 = vmatprep.subr.mxu0 0.0
        %1546 = vmatpush1.xpose.msra.mxu0 0.0
        %1547 = vmatprep.subr.mxu0 0.0
        %1548 = vmatpush1.xpose.msra.mxu0 0.0
        %1549 = vmatprep.subr.mxu0 0.0
        %1550 = vmatpush1.xpose.msra.mxu0 0.0
        %1551 = vmatprep.subr.mxu0 0.0
        %1552 = vmatpush1.xpose.msra.mxu0 0.0
        %1553 = vmatprep.subr.mxu0 0.0
        %1554 = vmatpush1.xpose.msra.mxu0 0.0
        %1555 = vmatprep.subr.mxu0 0.0
        %1556 = vmatpush1.xpose.msra.mxu0 0.0
        %1557 = vmatprep.subr.mxu0 0.0
        %1558 = vmatpush1.xpose.msra.mxu0 0.0
        %1559 = vmatprep.subr.mxu0 0.0
        %1560 = vmatpush1.xpose.msra.mxu0 0.0
        %1561 = vmatprep.subr.mxu0 0.0
        %1562 = vmatpush1.xpose.msra.mxu0 0.0
        %1563 = vmatprep.subr.mxu0 0.0
        %1564 = vmatpush1.xpose.msra.mxu0 0.0
        %1565 = vmatprep.subr.mxu0 0.0
        %1566 = vmatpush1.xpose.msra.mxu0 0.0
        %1567 = vmatprep.subr.mxu0 0.0
        %1568 = vmatpush1.xpose.msra.mxu0 0.0
        %1569 = vmatprep.mubr.f32.mxu0 0.0
        %1570 = vmatmul.mubr.f32.gmra.mrb[0].mxu0 %v1455
        %v1571 = vpop.f32.mrb[0].mxu0
        %v1572 = vadd.f32 %v1452, %v1571
        %v1573 = vpop.f32.mrb[0].mxu0
        %1574 = vdwg.mxu0
        %1575 = vst [vmem:[%s245] sm:$0x1] %v1572
        %s1576 = sand.u32 %s160, 1
        %s1577 = scalar_lea.sflag [#allocation4], %s1576
        %s1578 = sand.u32 %s160, 1
        %s1579 = scalar_lea.vmem [#allocation3], %s1578
        // Predicated region
        $region45: #{tpu_custom_call.1} parent=43 // pred_check
          %p1580 = pneg %p170
        $region46: #{tpu_custom_call.1} parent=43 // pred_check_branch
          %1582 = sbr.rel (%p1580) target = $region48
        $region47: #{tpu_custom_call.1} parent=43 // pred_region
          %s1584 = ssub.s32 16, 16
          %1585 = vsyncadd %s1577, %s1584
          %s1586 = smul.addr %s21, 16
          %s1587 = scalar_lea.hbm %s6, %s1586
          %s1589 = sshll.u32 %s1579, 4
          %s1590 = int_to_ptr.vmem [resolvable:$true] %s1589
          %1592 = dma.vmem_to_hbm [thread:$0]  %s1590, 16, %s1587, %s1577
        $region48: #{tpu_custom_call.1} parent=43 // pred_fallthru
          _
      $region44: #{tpu_custom_call.1} parent=5 // pred_fallthru
        _
      %p1593 = scmp.le.s32.totalorder 2, %s16
      // Predicated region
      $region49: #{tpu_custom_call.1} parent=5 // pred_check
        %p1594 = pneg %p1593
      $region50: #{tpu_custom_call.1} parent=5 // pred_check_branch
        %1596 = sbr.rel (%p1594) target = $region52
      $region51: #{tpu_custom_call.1} parent=5 // pred_region
        %s1597 = ssub.s32 %s16, 2
        // Predicated region
        $region53: #{tpu_custom_call.1} parent=51 // pred_check
          %p1598 = pneg %p176
        $region54: #{tpu_custom_call.1} parent=51 // pred_check_branch
          %1600 = sbr.rel (%p1598) target = $region56
        $region55: #{tpu_custom_call.1} parent=51 // pred_region
          %s1601 = sand.u32 %s161, 1
          %s1602 = scalar_lea.sflag [#allocation4], %s1601
          %s1603 = sand.u32 %s161, 1
          %s1604 = scalar_lea.vmem [#allocation3], %s1603
          %1605 = dma.done %s1602, 16
        $region56: #{tpu_custom_call.1} parent=51 // pred_fallthru
          _
      $region52: #{tpu_custom_call.1} parent=5 // pred_fallthru
        _
    $region6: #{tpu_custom_call.1} parent=1 // loop_footer
      %s20 = sadd.s32 1, %s16
    $region7: #{tpu_custom_call.1} parent=1 // loop_footer_branch
      %15 = sbr.rel target = $region3
    $region8: #{tpu_custom_call.1} parent=1 // loop_exit
      _
    %1606 = vsyncpa [#allocation4], 1
    %s1607 = scalar_lea.sflag [#allocation4], 1
    %1608 = vsyncpa %s1607, 1

</llo_original>
